<compile_context>
chip_gen: v5e
topology: v5e:2x2
jax: 0.10.0
libtpu: 0.0.40
codegen_flags: <defaults>
</compile_context>

<pallas_src>
import math

import jax
import jax.numpy as jnp
import numpy as np
from jax import lax
from jax.experimental import pallas as pl
from jax.experimental.pallas import tpu as pltpu

# ---------------- model hyper-parameters (small, deterministic) -------------
S = 8            # sequence length
B = 2            # batch
E = 32           # d_model
H = 4            # nhead
HD = E // H      # head dim
FF = 64          # dim_feedforward
L = 3            # num_layers (weight shared -> "universal")
EPS = 1e-5
SB = S * B       # fused (seq, batch) rows

LANE = 128       # TPU lane width; all packed slices start on these boundaries

# Packed weight slab column offsets (each piece padded to a 128-lane tile).
_COL_WQKV = 0 * LANE          # (E, 3E)  in columns [0, 96)
_COL_WO = 1 * LANE            # (E, E)   in columns [128, 160)
_COL_W1 = 2 * LANE            # (E, FF)  in columns [256, 320)
_WSLAB_W = 3 * LANE

# Packed bias / LayerNorm-param slab: one row per parameter, 128 lanes each.
ROW_BQKV, ROW_BO, ROW_B1, ROW_B2 = 0, 1, 2, 3
ROW_G1, ROW_BE1, ROW_G2, ROW_BE2, ROW_GF, ROW_BEF = 4, 5, 6, 7, 8, 9
VEC_ROWS = 10


def _layer_norm(x, gamma, beta):
    # torch.nn.LayerNorm over last dim, biased variance, eps=1e-5
    mu = jnp.mean(x, axis=-1, keepdims=True)
    xc = x - mu
    var = jnp.mean(xc * xc, axis=-1, keepdims=True)
    return xc * lax.rsqrt(var + EPS) * gamma + beta


def _encoder_kernel(x_ref, w_slab_ref, w2_ref, vec_ref, o_ref):
    """Whole batch in one invocation. x_ref: (S*B, E), rows in (s, b) order."""
    x = x_ref[...]                                       # (SB, E) float32

    # ---- static, lane-aligned slices of the packed weights (hoisted) -------
    w_slab = w_slab_ref[...]                             # (E, 3*128)
    wqkv = w_slab[:, _COL_WQKV:_COL_WQKV + 3 * E]        # (E, 3E)
    wo = w_slab[:, _COL_WO:_COL_WO + E]                  # (E, E)
    w1 = w_slab[:, _COL_W1:_COL_W1 + FF]                 # (E, FF)
    w2 = w2_ref[...]                                     # (FF, E)

    vec = vec_ref[...]                                   # (VEC_ROWS, 128)

    def brow(row, width):
        # Pre-broadcast bias / LN params once so the unrolled layer bodies
        # don't re-emit broadcast_in_dim per layer.
        return jnp.broadcast_to(vec[row:row + 1, 0:width], (SB, width))

    bqkv_b = brow(ROW_BQKV, 3 * E)
    bo_b = brow(ROW_BO, E)
    b1_b = brow(ROW_B1, FF)
    b2_b = brow(ROW_B2, E)
    g1_b, be1_b = brow(ROW_G1, E), brow(ROW_BE1, E)
    g2_b, be2_b = brow(ROW_G2, E), brow(ROW_BE2, E)
    gf_b, bef_b = brow(ROW_GF, E), brow(ROW_BEF, E)

    inv_sqrt_hd = jnp.float32(1.0 / math.sqrt(HD))

    # Batch-block mask (hoisted): row r = s*B + b; only same-batch tokens may
    # attend to each other once the batch is fused into the row dimension.
    ri = lax.broadcasted_iota(jnp.int32, (SB, SB), 0)
    ci = lax.broadcasted_iota(jnp.int32, (SB, SB), 1)
    neg_mask = jnp.where((ri % B) == (ci % B),
                         jnp.float32(0.0), jnp.float32(-1e30))

    def one_layer(h):
        # ---- fused-batch multi-head self attention --------------------------
        qkv = jnp.dot(h, wqkv, preferred_element_type=jnp.float32) + bqkv_b
        ctx_heads = []
        for hh in range(H):                              # static unroll, H=4
            q_h = qkv[:, 0 * E + hh * HD: 0 * E + (hh + 1) * HD] * inv_sqrt_hd
            k_h = qkv[:, 1 * E + hh * HD: 1 * E + (hh + 1) * HD]
            v_h = qkv[:, 2 * E + hh * HD: 2 * E + (hh + 1) * HD]
            s = jnp.einsum('nd,md->nm', q_h, k_h,
                           preferred_element_type=jnp.float32) + neg_mask
            # explicit softmax; the divide goes to the EUP (approx reciprocal)
            m = jnp.max(s, axis=-1, keepdims=True)
            e = jnp.exp(s - m)
            p = e * pl.reciprocal(jnp.sum(e, axis=-1, keepdims=True),
                                  approx=True)
            ctx_heads.append(
                jnp.dot(p, v_h, preferred_element_type=jnp.float32))
        ctx = jnp.concatenate(ctx_heads, axis=-1)        # (SB, E)
        attn = jnp.dot(ctx, wo, preferred_element_type=jnp.float32) + bo_b
        h = _layer_norm(h + attn, g1_b, be1_b)           # post-LN (norm1)
        # ---- feed forward ----------------------------------------------------
        ff = jnp.maximum(
            jnp.dot(h, w1, preferred_element_type=jnp.float32) + b1_b, 0.0)
        ff = jnp.dot(ff, w2, preferred_element_type=jnp.float32) + b2_b
        return _layer_norm(h + ff, g2_b, be2_b)          # post-LN (norm2)

    # L weight-shared layers, fully unrolled (L is a small static constant).
    h = x
    for _ in range(L):
        h = one_layer(h)
    h = _layer_norm(h, gf_b, bef_b)                      # optional final norm
    o_ref[...] = h.astype(o_ref.dtype)


@jax.jit
def universal_transformer_encoder(src, w_slab, w2_t, vec_slab):
    """src: (S, B, E) seq-first, like nn.TransformerEncoder. Returns (S, B, E)."""
    # TODO(synk): src_mask / src_key_padding_mask are not implemented (None path).
    x2 = src.reshape(SB, E)     # contiguous reshape: no transpose / relayout
    vmem = pl.BlockSpec(memory_space=pltpu.MemorySpace.VMEM)
    out2 = pl.pallas_call(
        _encoder_kernel,
        out_shape=jax.ShapeDtypeStruct((SB, E), jnp.float32),
        in_specs=[vmem, vmem, vmem, vmem],
        out_specs=vmem,
    )(x2, w_slab, w2_t, vec_slab)
    return out2.reshape(S, B, E)


# ------------------------- pure-JAX reference (for checking) ----------------
def reference(src, p):
    x = jnp.transpose(src, (1, 0, 2)).astype(jnp.float32)   # (B, S, E)

    def layer(h):
        qkv = h @ p['wqkv_t'] + p['bqkv']
        q = qkv[..., :E].reshape(B, S, H, HD)
        k = qkv[..., E:2 * E].reshape(B, S, H, HD)
        v = qkv[..., 2 * E:].reshape(B, S, H, HD)
        sc = jnp.einsum('bshd,bthd->bhst', q, k) / math.sqrt(HD)
        pr = jax.nn.softmax(sc, axis=-1)
        ctx = jnp.einsum('bhst,bthd->bshd', pr, v).reshape(B, S, E)
        attn = ctx @ p['wo_t'] + p['bo']
        h = _layer_norm(h + attn, p['g1'], p['be1'])
        ff = jnp.maximum(h @ p['w1_t'] + p['b1'], 0.0) @ p['w2_t'] + p['b2']
        return _layer_norm(h + ff, p['g2'], p['be2'])

    for _ in range(L):
        x = layer(x)
    x = _layer_norm(x, p['gf'], p['bef'])
    return jnp.transpose(x, (1, 0, 2))


# ------------------------------ parameter init -------------------------------
def init_params(key):
    ks = jax.random.split(key, 8)
    scale = 0.1
    # PyTorch Linear stores weight as (out, in); we pre-transpose to (in, out)
    # so the kernel computes x @ W_t + b.
    in_proj_w = scale * jax.random.normal(ks[0], (3 * E, E), jnp.float32)
    out_proj_w = scale * jax.random.normal(ks[1], (E, E), jnp.float32)
    lin1_w = scale * jax.random.normal(ks[2], (FF, E), jnp.float32)
    lin2_w = scale * jax.random.normal(ks[3], (E, FF), jnp.float32)
    return {
        'wqkv_t': in_proj_w.T,                                   # (E, 3E)
        'bqkv': scale * jax.random.normal(ks[4], (1, 3 * E), jnp.float32),
        'wo_t': out_proj_w.T,                                    # (E, E)
        'bo': scale * jax.random.normal(ks[5], (1, E), jnp.float32),
        'w1_t': lin1_w.T,                                        # (E, FF)
        'b1': scale * jax.random.normal(ks[6], (1, FF), jnp.float32),
        'w2_t': lin2_w.T,                                        # (FF, E)
        'b2': scale * jax.random.normal(ks[7], (1, E), jnp.float32),
        # LayerNorm affine params (torch default init: weight=1, bias=0)
        'g1': jnp.ones((1, E), jnp.float32), 'be1': jnp.zeros((1, E), jnp.float32),
        'g2': jnp.ones((1, E), jnp.float32), 'be2': jnp.zeros((1, E), jnp.float32),
        'gf': jnp.ones((1, E), jnp.float32), 'bef': jnp.zeros((1, E), jnp.float32),
    }


def _pad_lanes(a, width):
    return jnp.pad(a, ((0, 0), (0, width - a.shape[1])))


def pack_params(p):
    """Pack weights/biases/LN-params into 3 slabs (done ONCE at init time).

    Every packed piece is padded to a 128-lane boundary so all in-kernel
    slices are lane-tile aligned (no cross-tile lane rotates at unpack time).
    """
    w_slab = jnp.concatenate(
        [_pad_lanes(p['wqkv_t'], LANE),      # cols [0, 128)
         _pad_lanes(p['wo_t'], LANE),        # cols [128, 256)
         _pad_lanes(p['w1_t'], LANE)],       # cols [256, 384)
        axis=1)                              # (E, 384)
    assert w_slab.shape == (E, _WSLAB_W)
    vec_slab = jnp.concatenate(
        [_pad_lanes(p['bqkv'], LANE), _pad_lanes(p['bo'], LANE),
         _pad_lanes(p['b1'], LANE), _pad_lanes(p['b2'], LANE),
         _pad_lanes(p['g1'], LANE), _pad_lanes(p['be1'], LANE),
         _pad_lanes(p['g2'], LANE), _pad_lanes(p['be2'], LANE),
         _pad_lanes(p['gf'], LANE), _pad_lanes(p['bef'], LANE)],
        axis=0)                              # (VEC_ROWS, 128)
    assert vec_slab.shape == (VEC_ROWS, LANE)
    return w_slab, p['w2_t'], vec_slab


if __name__ == "__main__":
    key = jax.random.PRNGKey(0)
    k_src, k_par = jax.random.split(key)
    src = jax.random.normal(k_src, (S, B, E), jnp.float32)   # (seq, batch, embed)
    params = init_params(k_par)
    w_slab, w2_t, vec_slab = pack_params(params)             # packed once

    out = universal_transformer_encoder(src, w_slab, w2_t, vec_slab)
    out = jax.block_until_ready(out)

    ref = jax.block_until_ready(reference(src, params))
    assert out.shape == (S, B, E)
    # Slightly loosened tolerance: the kernel uses the EUP approximate
    # reciprocal (pl.reciprocal(..., approx=True)) in the softmax denominator.
    np.testing.assert_allclose(np.asarray(out), np.asarray(ref),
                               rtol=5e-3, atol=5e-3)
    print("KERNEL_OK")
</pallas_src>

<mosaic_0001>
module attributes {stable_mosaic.version = 11 : i64} {
  func.func @_encoder_kernel(%arg0: memref<16x32xf32, #tpu.memory_space<vmem>>, %arg1: memref<32x384xf32, #tpu.memory_space<vmem>>, %arg2: memref<64x32xf32, #tpu.memory_space<vmem>>, %arg3: memref<10x128xf32, #tpu.memory_space<vmem>>, %arg4: memref<16x32xf32, #tpu.memory_space<vmem>>) attributes {dimension_semantics = [], scalar_prefetch = 0 : i64, scratch_operands = 0 : i64, tpu.core_type = #tpu.core_type<tc>} {
    %c0 = arith.constant 0 : index
    %c0_0 = arith.constant 0 : index
    %0 = vector.load %arg0[%c0, %c0_0] : memref<16x32xf32, #tpu.memory_space<vmem>>, vector<16x32xf32>
    %c0_1 = arith.constant 0 : index
    %c0_2 = arith.constant 0 : index
    %1 = vector.load %arg1[%c0_1, %c0_2] : memref<32x384xf32, #tpu.memory_space<vmem>>, vector<32x384xf32>
    %2 = vector.extract_strided_slice %1 {offsets = [0, 0], sizes = [32, 96], strides = [1, 1]} : vector<32x384xf32> to vector<32x96xf32>
    %3 = vector.extract_strided_slice %1 {offsets = [0, 128], sizes = [32, 32], strides = [1, 1]} : vector<32x384xf32> to vector<32x32xf32>
    %4 = vector.extract_strided_slice %1 {offsets = [0, 256], sizes = [32, 64], strides = [1, 1]} : vector<32x384xf32> to vector<32x64xf32>
    %c0_3 = arith.constant 0 : index
    %c0_4 = arith.constant 0 : index
    %5 = vector.load %arg2[%c0_3, %c0_4] : memref<64x32xf32, #tpu.memory_space<vmem>>, vector<64x32xf32>
    %c0_5 = arith.constant 0 : index
    %c0_6 = arith.constant 0 : index
    %6 = vector.load %arg3[%c0_5, %c0_6] : memref<10x128xf32, #tpu.memory_space<vmem>>, vector<10x128xf32>
    %7 = vector.extract_strided_slice %6 {offsets = [0, 0], sizes = [1, 96], strides = [1, 1]} : vector<10x128xf32> to vector<1x96xf32>
    %8 = vector.shape_cast %7 : vector<1x96xf32> to vector<1x96xf32>
    %9 = vector.broadcast %8 : vector<1x96xf32> to vector<16x96xf32>
    %10 = vector.extract_strided_slice %6 {offsets = [1, 0], sizes = [1, 32], strides = [1, 1]} : vector<10x128xf32> to vector<1x32xf32>
    %11 = vector.shape_cast %10 : vector<1x32xf32> to vector<1x32xf32>
    %12 = vector.broadcast %11 : vector<1x32xf32> to vector<16x32xf32>
    %13 = vector.extract_strided_slice %6 {offsets = [2, 0], sizes = [1, 64], strides = [1, 1]} : vector<10x128xf32> to vector<1x64xf32>
    %14 = vector.shape_cast %13 : vector<1x64xf32> to vector<1x64xf32>
    %15 = vector.broadcast %14 : vector<1x64xf32> to vector<16x64xf32>
    %16 = vector.extract_strided_slice %6 {offsets = [3, 0], sizes = [1, 32], strides = [1, 1]} : vector<10x128xf32> to vector<1x32xf32>
    %17 = vector.shape_cast %16 : vector<1x32xf32> to vector<1x32xf32>
    %18 = vector.broadcast %17 : vector<1x32xf32> to vector<16x32xf32>
    %19 = vector.extract_strided_slice %6 {offsets = [4, 0], sizes = [1, 32], strides = [1, 1]} : vector<10x128xf32> to vector<1x32xf32>
    %20 = vector.shape_cast %19 : vector<1x32xf32> to vector<1x32xf32>
    %21 = vector.broadcast %20 : vector<1x32xf32> to vector<16x32xf32>
    %22 = vector.extract_strided_slice %6 {offsets = [5, 0], sizes = [1, 32], strides = [1, 1]} : vector<10x128xf32> to vector<1x32xf32>
    %23 = vector.shape_cast %22 : vector<1x32xf32> to vector<1x32xf32>
    %24 = vector.broadcast %23 : vector<1x32xf32> to vector<16x32xf32>
    %25 = vector.extract_strided_slice %6 {offsets = [6, 0], sizes = [1, 32], strides = [1, 1]} : vector<10x128xf32> to vector<1x32xf32>
    %26 = vector.shape_cast %25 : vector<1x32xf32> to vector<1x32xf32>
    %27 = vector.broadcast %26 : vector<1x32xf32> to vector<16x32xf32>
    %28 = vector.extract_strided_slice %6 {offsets = [7, 0], sizes = [1, 32], strides = [1, 1]} : vector<10x128xf32> to vector<1x32xf32>
    %29 = vector.shape_cast %28 : vector<1x32xf32> to vector<1x32xf32>
    %30 = vector.broadcast %29 : vector<1x32xf32> to vector<16x32xf32>
    %31 = vector.extract_strided_slice %6 {offsets = [8, 0], sizes = [1, 32], strides = [1, 1]} : vector<10x128xf32> to vector<1x32xf32>
    %32 = vector.shape_cast %31 : vector<1x32xf32> to vector<1x32xf32>
    %33 = vector.broadcast %32 : vector<1x32xf32> to vector<16x32xf32>
    %34 = vector.extract_strided_slice %6 {offsets = [9, 0], sizes = [1, 32], strides = [1, 1]} : vector<10x128xf32> to vector<1x32xf32>
    %35 = vector.shape_cast %34 : vector<1x32xf32> to vector<1x32xf32>
    %36 = vector.broadcast %35 : vector<1x32xf32> to vector<16x32xf32>
    %37 = tpu.iota {dimensions = array<i32: 0>} : vector<16x16xi32>
    %38 = tpu.iota {dimensions = array<i32: 1>} : vector<16x16xi32>
    %c2_i32 = arith.constant 2 : i32
    %c0_i32 = arith.constant 0 : i32
    %39 = arith.cmpi eq, %c2_i32, %c0_i32 : i32
    %c1_i32 = arith.constant 1 : i32
    %40 = arith.select %39, %c1_i32, %c2_i32 : i32
    %41 = vector.broadcast %40 : i32 to vector<16x16xi32>
    %42 = arith.remsi %37, %41 : vector<16x16xi32>
    %c0_i32_7 = arith.constant 0 : i32
    %43 = vector.broadcast %c0_i32_7 : i32 to vector<16x16xi32>
    %44 = arith.cmpi ne, %42, %43 : vector<16x16xi32>
    %c0_i32_8 = arith.constant 0 : i32
    %45 = vector.broadcast %c0_i32_8 : i32 to vector<16x16xi32>
    %46 = arith.cmpi slt, %42, %45 : vector<16x16xi32>
    %c0_i32_9 = arith.constant 0 : i32
    %47 = arith.cmpi slt, %40, %c0_i32_9 : i32
    %48 = vector.broadcast %47 : i1 to vector<16x16xi1>
    %49 = vector.broadcast %48 : vector<16x16xi1> to vector<16x16xi1>
    %50 = arith.xori %46, %49 : vector<16x16xi1>
    %51 = arith.andi %50, %44 : vector<16x16xi1>
    %52 = vector.broadcast %40 : i32 to vector<16x16xi32>
    %53 = arith.addi %42, %52 : vector<16x16xi32>
    %54 = arith.select %51, %53, %42 : vector<16x16xi1>, vector<16x16xi32>
    %c2_i32_10 = arith.constant 2 : i32
    %c0_i32_11 = arith.constant 0 : i32
    %55 = arith.cmpi eq, %c2_i32_10, %c0_i32_11 : i32
    %c1_i32_12 = arith.constant 1 : i32
    %56 = arith.select %55, %c1_i32_12, %c2_i32_10 : i32
    %57 = vector.broadcast %56 : i32 to vector<16x16xi32>
    %58 = arith.remsi %38, %57 : vector<16x16xi32>
    %c0_i32_13 = arith.constant 0 : i32
    %59 = vector.broadcast %c0_i32_13 : i32 to vector<16x16xi32>
    %60 = arith.cmpi ne, %58, %59 : vector<16x16xi32>
    %c0_i32_14 = arith.constant 0 : i32
    %61 = vector.broadcast %c0_i32_14 : i32 to vector<16x16xi32>
    %62 = arith.cmpi slt, %58, %61 : vector<16x16xi32>
    %c0_i32_15 = arith.constant 0 : i32
    %63 = arith.cmpi slt, %56, %c0_i32_15 : i32
    %64 = vector.broadcast %63 : i1 to vector<16x16xi1>
    %65 = vector.broadcast %64 : vector<16x16xi1> to vector<16x16xi1>
    %66 = arith.xori %62, %65 : vector<16x16xi1>
    %67 = arith.andi %66, %60 : vector<16x16xi1>
    %68 = vector.broadcast %56 : i32 to vector<16x16xi32>
    %69 = arith.addi %58, %68 : vector<16x16xi32>
    %70 = arith.select %67, %69, %58 : vector<16x16xi1>, vector<16x16xi32>
    %71 = arith.cmpi eq, %54, %70 : vector<16x16xi32>
    %cst = arith.constant 0.000000e+00 : f32
    %cst_16 = arith.constant -1.000000e+30 : f32
    %72 = vector.broadcast %cst : f32 to vector<16x16xf32>
    %73 = vector.broadcast %cst_16 : f32 to vector<16x16xf32>
    %74 = arith.select %71, %72, %73 : vector<16x16xi1>, vector<16x16xf32>
    %cst_17 = arith.constant dense<0.000000e+00> : vector<16x96xf32>
    %75 = tpu.matmul %0, %2, %cst_17 {dimension_numbers = #tpu.dot_dimension_numbers<[1], [0], [0], [1], [0, 0, 1, 1], [], []>} : vector<16x32xf32>, vector<32x96xf32>, vector<16x96xf32> -> vector<16x96xf32>
    %76 = arith.addf %75, %9 : vector<16x96xf32>
    %77 = vector.extract_strided_slice %76 {offsets = [0, 0], sizes = [16, 8], strides = [1, 1]} : vector<16x96xf32> to vector<16x8xf32>
    %cst_18 = arith.constant 0.353553385 : f32
    %78 = vector.broadcast %cst_18 : f32 to vector<16x8xf32>
    %79 = arith.mulf %77, %78 : vector<16x8xf32>
    %80 = vector.extract_strided_slice %76 {offsets = [0, 32], sizes = [16, 8], strides = [1, 1]} : vector<16x96xf32> to vector<16x8xf32>
    %81 = vector.extract_strided_slice %76 {offsets = [0, 64], sizes = [16, 8], strides = [1, 1]} : vector<16x96xf32> to vector<16x8xf32>
    "tpu.trace_start"() <{level = 10 : i32, message = "nd,md->nm"}> : () -> ()
    %cst_19 = arith.constant dense<0.000000e+00> : vector<16x16xf32>
    %82 = tpu.matmul %79, %80, %cst_19 {dimension_numbers = #tpu.dot_dimension_numbers<[1], [1], [0], [0], [0, 0, 1, 0], [], []>} : vector<16x8xf32>, vector<16x8xf32>, vector<16x16xf32> -> vector<16x16xf32>
    "tpu.trace_stop"() : () -> ()
    %83 = arith.addf %82, %74 : vector<16x16xf32>
    %cst_20 = arith.constant dense<0xFF800000> : vector<16xf32>
    %84 = vector.multi_reduction <maximumf>, %83, %cst_20 [1] : vector<16x16xf32> to vector<16xf32>
    %85 = vector.shape_cast %84 : vector<16xf32> to vector<16x1xf32>
    %86 = vector.broadcast %85 : vector<16x1xf32> to vector<16x16xf32>
    %87 = arith.subf %83, %86 : vector<16x16xf32>
    %88 = math.exp %87 : vector<16x16xf32>
    %cst_21 = arith.constant dense<0.000000e+00> : vector<16xf32>
    %89 = vector.multi_reduction <add>, %88, %cst_21 [1] : vector<16x16xf32> to vector<16xf32>
    %90 = vector.shape_cast %89 : vector<16xf32> to vector<16x1xf32>
    %91 = tpu.reciprocal %90 {approx = true} : vector<16x1xf32> -> vector<16x1xf32>
    %92 = vector.broadcast %91 : vector<16x1xf32> to vector<16x16xf32>
    %93 = arith.mulf %88, %92 : vector<16x16xf32>
    %cst_22 = arith.constant dense<0.000000e+00> : vector<16x8xf32>
    %94 = tpu.matmul %93, %81, %cst_22 {dimension_numbers = #tpu.dot_dimension_numbers<[1], [0], [0], [1], [0, 0, 1, 1], [], []>} : vector<16x16xf32>, vector<16x8xf32>, vector<16x8xf32> -> vector<16x8xf32>
    %95 = vector.extract_strided_slice %76 {offsets = [0, 8], sizes = [16, 8], strides = [1, 1]} : vector<16x96xf32> to vector<16x8xf32>
    %cst_23 = arith.constant 0.353553385 : f32
    %96 = vector.broadcast %cst_23 : f32 to vector<16x8xf32>
    %97 = arith.mulf %95, %96 : vector<16x8xf32>
    %98 = vector.extract_strided_slice %76 {offsets = [0, 40], sizes = [16, 8], strides = [1, 1]} : vector<16x96xf32> to vector<16x8xf32>
    %99 = vector.extract_strided_slice %76 {offsets = [0, 72], sizes = [16, 8], strides = [1, 1]} : vector<16x96xf32> to vector<16x8xf32>
    "tpu.trace_start"() <{level = 10 : i32, message = "nd,md->nm"}> : () -> ()
    %cst_24 = arith.constant dense<0.000000e+00> : vector<16x16xf32>
    %100 = tpu.matmul %97, %98, %cst_24 {dimension_numbers = #tpu.dot_dimension_numbers<[1], [1], [0], [0], [0, 0, 1, 0], [], []>} : vector<16x8xf32>, vector<16x8xf32>, vector<16x16xf32> -> vector<16x16xf32>
    "tpu.trace_stop"() : () -> ()
    %101 = arith.addf %100, %74 : vector<16x16xf32>
    %cst_25 = arith.constant dense<0xFF800000> : vector<16xf32>
    %102 = vector.multi_reduction <maximumf>, %101, %cst_25 [1] : vector<16x16xf32> to vector<16xf32>
    %103 = vector.shape_cast %102 : vector<16xf32> to vector<16x1xf32>
    %104 = vector.broadcast %103 : vector<16x1xf32> to vector<16x16xf32>
    %105 = arith.subf %101, %104 : vector<16x16xf32>
    %106 = math.exp %105 : vector<16x16xf32>
    %cst_26 = arith.constant dense<0.000000e+00> : vector<16xf32>
    %107 = vector.multi_reduction <add>, %106, %cst_26 [1] : vector<16x16xf32> to vector<16xf32>
    %108 = vector.shape_cast %107 : vector<16xf32> to vector<16x1xf32>
    %109 = tpu.reciprocal %108 {approx = true} : vector<16x1xf32> -> vector<16x1xf32>
    %110 = vector.broadcast %109 : vector<16x1xf32> to vector<16x16xf32>
    %111 = arith.mulf %106, %110 : vector<16x16xf32>
    %cst_27 = arith.constant dense<0.000000e+00> : vector<16x8xf32>
    %112 = tpu.matmul %111, %99, %cst_27 {dimension_numbers = #tpu.dot_dimension_numbers<[1], [0], [0], [1], [0, 0, 1, 1], [], []>} : vector<16x16xf32>, vector<16x8xf32>, vector<16x8xf32> -> vector<16x8xf32>
    %113 = vector.extract_strided_slice %76 {offsets = [0, 16], sizes = [16, 8], strides = [1, 1]} : vector<16x96xf32> to vector<16x8xf32>
    %cst_28 = arith.constant 0.353553385 : f32
    %114 = vector.broadcast %cst_28 : f32 to vector<16x8xf32>
    %115 = arith.mulf %113, %114 : vector<16x8xf32>
    %116 = vector.extract_strided_slice %76 {offsets = [0, 48], sizes = [16, 8], strides = [1, 1]} : vector<16x96xf32> to vector<16x8xf32>
    %117 = vector.extract_strided_slice %76 {offsets = [0, 80], sizes = [16, 8], strides = [1, 1]} : vector<16x96xf32> to vector<16x8xf32>
    "tpu.trace_start"() <{level = 10 : i32, message = "nd,md->nm"}> : () -> ()
    %cst_29 = arith.constant dense<0.000000e+00> : vector<16x16xf32>
    %118 = tpu.matmul %115, %116, %cst_29 {dimension_numbers = #tpu.dot_dimension_numbers<[1], [1], [0], [0], [0, 0, 1, 0], [], []>} : vector<16x8xf32>, vector<16x8xf32>, vector<16x16xf32> -> vector<16x16xf32>
    "tpu.trace_stop"() : () -> ()
    %119 = arith.addf %118, %74 : vector<16x16xf32>
    %cst_30 = arith.constant dense<0xFF800000> : vector<16xf32>
    %120 = vector.multi_reduction <maximumf>, %119, %cst_30 [1] : vector<16x16xf32> to vector<16xf32>
    %121 = vector.shape_cast %120 : vector<16xf32> to vector<16x1xf32>
    %122 = vector.broadcast %121 : vector<16x1xf32> to vector<16x16xf32>
    %123 = arith.subf %119, %122 : vector<16x16xf32>
    %124 = math.exp %123 : vector<16x16xf32>
    %cst_31 = arith.constant dense<0.000000e+00> : vector<16xf32>
    %125 = vector.multi_reduction <add>, %124, %cst_31 [1] : vector<16x16xf32> to vector<16xf32>
    %126 = vector.shape_cast %125 : vector<16xf32> to vector<16x1xf32>
    %127 = tpu.reciprocal %126 {approx = true} : vector<16x1xf32> -> vector<16x1xf32>
    %128 = vector.broadcast %127 : vector<16x1xf32> to vector<16x16xf32>
    %129 = arith.mulf %124, %128 : vector<16x16xf32>
    %cst_32 = arith.constant dense<0.000000e+00> : vector<16x8xf32>
    %130 = tpu.matmul %129, %117, %cst_32 {dimension_numbers = #tpu.dot_dimension_numbers<[1], [0], [0], [1], [0, 0, 1, 1], [], []>} : vector<16x16xf32>, vector<16x8xf32>, vector<16x8xf32> -> vector<16x8xf32>
    %131 = vector.extract_strided_slice %76 {offsets = [0, 24], sizes = [16, 8], strides = [1, 1]} : vector<16x96xf32> to vector<16x8xf32>
    %cst_33 = arith.constant 0.353553385 : f32
    %132 = vector.broadcast %cst_33 : f32 to vector<16x8xf32>
    %133 = arith.mulf %131, %132 : vector<16x8xf32>
    %134 = vector.extract_strided_slice %76 {offsets = [0, 56], sizes = [16, 8], strides = [1, 1]} : vector<16x96xf32> to vector<16x8xf32>
    %135 = vector.extract_strided_slice %76 {offsets = [0, 88], sizes = [16, 8], strides = [1, 1]} : vector<16x96xf32> to vector<16x8xf32>
    "tpu.trace_start"() <{level = 10 : i32, message = "nd,md->nm"}> : () -> ()
    %cst_34 = arith.constant dense<0.000000e+00> : vector<16x16xf32>
    %136 = tpu.matmul %133, %134, %cst_34 {dimension_numbers = #tpu.dot_dimension_numbers<[1], [1], [0], [0], [0, 0, 1, 0], [], []>} : vector<16x8xf32>, vector<16x8xf32>, vector<16x16xf32> -> vector<16x16xf32>
    "tpu.trace_stop"() : () -> ()
    %137 = arith.addf %136, %74 : vector<16x16xf32>
    %cst_35 = arith.constant dense<0xFF800000> : vector<16xf32>
    %138 = vector.multi_reduction <maximumf>, %137, %cst_35 [1] : vector<16x16xf32> to vector<16xf32>
    %139 = vector.shape_cast %138 : vector<16xf32> to vector<16x1xf32>
    %140 = vector.broadcast %139 : vector<16x1xf32> to vector<16x16xf32>
    %141 = arith.subf %137, %140 : vector<16x16xf32>
    %142 = math.exp %141 : vector<16x16xf32>
    %cst_36 = arith.constant dense<0.000000e+00> : vector<16xf32>
    %143 = vector.multi_reduction <add>, %142, %cst_36 [1] : vector<16x16xf32> to vector<16xf32>
    %144 = vector.shape_cast %143 : vector<16xf32> to vector<16x1xf32>
    %145 = tpu.reciprocal %144 {approx = true} : vector<16x1xf32> -> vector<16x1xf32>
    %146 = vector.broadcast %145 : vector<16x1xf32> to vector<16x16xf32>
    %147 = arith.mulf %142, %146 : vector<16x16xf32>
    %cst_37 = arith.constant dense<0.000000e+00> : vector<16x8xf32>
    %148 = tpu.matmul %147, %135, %cst_37 {dimension_numbers = #tpu.dot_dimension_numbers<[1], [0], [0], [1], [0, 0, 1, 1], [], []>} : vector<16x16xf32>, vector<16x8xf32>, vector<16x8xf32> -> vector<16x8xf32>
    %149 = tpu.concatenate %94, %112, %130, %148 in 1 : vector<16x8xf32>, vector<16x8xf32>, vector<16x8xf32>, vector<16x8xf32> -> vector<16x32xf32>
    %cst_38 = arith.constant dense<0.000000e+00> : vector<16x32xf32>
    %150 = tpu.matmul %149, %3, %cst_38 {dimension_numbers = #tpu.dot_dimension_numbers<[1], [0], [0], [1], [0, 0, 1, 1], [], []>} : vector<16x32xf32>, vector<32x32xf32>, vector<16x32xf32> -> vector<16x32xf32>
    %151 = arith.addf %150, %12 : vector<16x32xf32>
    %152 = arith.addf %0, %151 : vector<16x32xf32>
    %cst_39 = arith.constant dense<0.000000e+00> : vector<16xf32>
    %153 = vector.multi_reduction <add>, %152, %cst_39 [1] : vector<16x32xf32> to vector<16xf32>
    %154 = vector.shape_cast %153 : vector<16xf32> to vector<16x1xf32>
    %cst_40 = arith.constant 3.200000e+01 : f32
    %155 = vector.broadcast %cst_40 : f32 to vector<16x1xf32>
    %156 = arith.divf %154, %155 : vector<16x1xf32>
    %157 = vector.broadcast %156 : vector<16x1xf32> to vector<16x32xf32>
    %158 = arith.subf %152, %157 : vector<16x32xf32>
    %159 = arith.mulf %158, %158 : vector<16x32xf32>
    %cst_41 = arith.constant dense<0.000000e+00> : vector<16xf32>
    %160 = vector.multi_reduction <add>, %159, %cst_41 [1] : vector<16x32xf32> to vector<16xf32>
    %161 = vector.shape_cast %160 : vector<16xf32> to vector<16x1xf32>
    %cst_42 = arith.constant 3.200000e+01 : f32
    %162 = vector.broadcast %cst_42 : f32 to vector<16x1xf32>
    %163 = arith.divf %161, %162 : vector<16x1xf32>
    %cst_43 = arith.constant 9.99999974E-6 : f32
    %164 = vector.broadcast %cst_43 : f32 to vector<16x1xf32>
    %165 = arith.addf %163, %164 : vector<16x1xf32>
    %166 = math.rsqrt %165 : vector<16x1xf32>
    %167 = vector.broadcast %166 : vector<16x1xf32> to vector<16x32xf32>
    %168 = arith.mulf %158, %167 : vector<16x32xf32>
    %169 = arith.mulf %168, %21 : vector<16x32xf32>
    %170 = arith.addf %169, %24 : vector<16x32xf32>
    %cst_44 = arith.constant dense<0.000000e+00> : vector<16x64xf32>
    %171 = tpu.matmul %170, %4, %cst_44 {dimension_numbers = #tpu.dot_dimension_numbers<[1], [0], [0], [1], [0, 0, 1, 1], [], []>} : vector<16x32xf32>, vector<32x64xf32>, vector<16x64xf32> -> vector<16x64xf32>
    %172 = arith.addf %171, %15 : vector<16x64xf32>
    %cst_45 = arith.constant 0.000000e+00 : f32
    %173 = vector.broadcast %cst_45 : f32 to vector<16x64xf32>
    %174 = arith.maximumf %172, %173 : vector<16x64xf32>
    %cst_46 = arith.constant dense<0.000000e+00> : vector<16x32xf32>
    %175 = tpu.matmul %174, %5, %cst_46 {dimension_numbers = #tpu.dot_dimension_numbers<[1], [0], [0], [1], [0, 0, 1, 1], [], []>} : vector<16x64xf32>, vector<64x32xf32>, vector<16x32xf32> -> vector<16x32xf32>
    %176 = arith.addf %175, %18 : vector<16x32xf32>
    %177 = arith.addf %170, %176 : vector<16x32xf32>
    %cst_47 = arith.constant dense<0.000000e+00> : vector<16xf32>
    %178 = vector.multi_reduction <add>, %177, %cst_47 [1] : vector<16x32xf32> to vector<16xf32>
    %179 = vector.shape_cast %178 : vector<16xf32> to vector<16x1xf32>
    %cst_48 = arith.constant 3.200000e+01 : f32
    %180 = vector.broadcast %cst_48 : f32 to vector<16x1xf32>
    %181 = arith.divf %179, %180 : vector<16x1xf32>
    %182 = vector.broadcast %181 : vector<16x1xf32> to vector<16x32xf32>
    %183 = arith.subf %177, %182 : vector<16x32xf32>
    %184 = arith.mulf %183, %183 : vector<16x32xf32>
    %cst_49 = arith.constant dense<0.000000e+00> : vector<16xf32>
    %185 = vector.multi_reduction <add>, %184, %cst_49 [1] : vector<16x32xf32> to vector<16xf32>
    %186 = vector.shape_cast %185 : vector<16xf32> to vector<16x1xf32>
    %cst_50 = arith.constant 3.200000e+01 : f32
    %187 = vector.broadcast %cst_50 : f32 to vector<16x1xf32>
    %188 = arith.divf %186, %187 : vector<16x1xf32>
    %cst_51 = arith.constant 9.99999974E-6 : f32
    %189 = vector.broadcast %cst_51 : f32 to vector<16x1xf32>
    %190 = arith.addf %188, %189 : vector<16x1xf32>
    %191 = math.rsqrt %190 : vector<16x1xf32>
    %192 = vector.broadcast %191 : vector<16x1xf32> to vector<16x32xf32>
    %193 = arith.mulf %183, %192 : vector<16x32xf32>
    %194 = arith.mulf %193, %27 : vector<16x32xf32>
    %195 = arith.addf %194, %30 : vector<16x32xf32>
    %cst_52 = arith.constant dense<0.000000e+00> : vector<16x96xf32>
    %196 = tpu.matmul %195, %2, %cst_52 {dimension_numbers = #tpu.dot_dimension_numbers<[1], [0], [0], [1], [0, 0, 1, 1], [], []>} : vector<16x32xf32>, vector<32x96xf32>, vector<16x96xf32> -> vector<16x96xf32>
    %197 = arith.addf %196, %9 : vector<16x96xf32>
    %198 = vector.extract_strided_slice %197 {offsets = [0, 0], sizes = [16, 8], strides = [1, 1]} : vector<16x96xf32> to vector<16x8xf32>
    %cst_53 = arith.constant 0.353553385 : f32
    %199 = vector.broadcast %cst_53 : f32 to vector<16x8xf32>
    %200 = arith.mulf %198, %199 : vector<16x8xf32>
    %201 = vector.extract_strided_slice %197 {offsets = [0, 32], sizes = [16, 8], strides = [1, 1]} : vector<16x96xf32> to vector<16x8xf32>
    %202 = vector.extract_strided_slice %197 {offsets = [0, 64], sizes = [16, 8], strides = [1, 1]} : vector<16x96xf32> to vector<16x8xf32>
    "tpu.trace_start"() <{level = 10 : i32, message = "nd,md->nm"}> : () -> ()
    %cst_54 = arith.constant dense<0.000000e+00> : vector<16x16xf32>
    %203 = tpu.matmul %200, %201, %cst_54 {dimension_numbers = #tpu.dot_dimension_numbers<[1], [1], [0], [0], [0, 0, 1, 0], [], []>} : vector<16x8xf32>, vector<16x8xf32>, vector<16x16xf32> -> vector<16x16xf32>
    "tpu.trace_stop"() : () -> ()
    %204 = arith.addf %203, %74 : vector<16x16xf32>
    %cst_55 = arith.constant dense<0xFF800000> : vector<16xf32>
    %205 = vector.multi_reduction <maximumf>, %204, %cst_55 [1] : vector<16x16xf32> to vector<16xf32>
    %206 = vector.shape_cast %205 : vector<16xf32> to vector<16x1xf32>
    %207 = vector.broadcast %206 : vector<16x1xf32> to vector<16x16xf32>
    %208 = arith.subf %204, %207 : vector<16x16xf32>
    %209 = math.exp %208 : vector<16x16xf32>
    %cst_56 = arith.constant dense<0.000000e+00> : vector<16xf32>
    %210 = vector.multi_reduction <add>, %209, %cst_56 [1] : vector<16x16xf32> to vector<16xf32>
    %211 = vector.shape_cast %210 : vector<16xf32> to vector<16x1xf32>
    %212 = tpu.reciprocal %211 {approx = true} : vector<16x1xf32> -> vector<16x1xf32>
    %213 = vector.broadcast %212 : vector<16x1xf32> to vector<16x16xf32>
    %214 = arith.mulf %209, %213 : vector<16x16xf32>
    %cst_57 = arith.constant dense<0.000000e+00> : vector<16x8xf32>
    %215 = tpu.matmul %214, %202, %cst_57 {dimension_numbers = #tpu.dot_dimension_numbers<[1], [0], [0], [1], [0, 0, 1, 1], [], []>} : vector<16x16xf32>, vector<16x8xf32>, vector<16x8xf32> -> vector<16x8xf32>
    %216 = vector.extract_strided_slice %197 {offsets = [0, 8], sizes = [16, 8], strides = [1, 1]} : vector<16x96xf32> to vector<16x8xf32>
    %cst_58 = arith.constant 0.353553385 : f32
    %217 = vector.broadcast %cst_58 : f32 to vector<16x8xf32>
    %218 = arith.mulf %216, %217 : vector<16x8xf32>
    %219 = vector.extract_strided_slice %197 {offsets = [0, 40], sizes = [16, 8], strides = [1, 1]} : vector<16x96xf32> to vector<16x8xf32>
    %220 = vector.extract_strided_slice %197 {offsets = [0, 72], sizes = [16, 8], strides = [1, 1]} : vector<16x96xf32> to vector<16x8xf32>
    "tpu.trace_start"() <{level = 10 : i32, message = "nd,md->nm"}> : () -> ()
    %cst_59 = arith.constant dense<0.000000e+00> : vector<16x16xf32>
    %221 = tpu.matmul %218, %219, %cst_59 {dimension_numbers = #tpu.dot_dimension_numbers<[1], [1], [0], [0], [0, 0, 1, 0], [], []>} : vector<16x8xf32>, vector<16x8xf32>, vector<16x16xf32> -> vector<16x16xf32>
    "tpu.trace_stop"() : () -> ()
    %222 = arith.addf %221, %74 : vector<16x16xf32>
    %cst_60 = arith.constant dense<0xFF800000> : vector<16xf32>
    %223 = vector.multi_reduction <maximumf>, %222, %cst_60 [1] : vector<16x16xf32> to vector<16xf32>
    %224 = vector.shape_cast %223 : vector<16xf32> to vector<16x1xf32>
    %225 = vector.broadcast %224 : vector<16x1xf32> to vector<16x16xf32>
    %226 = arith.subf %222, %225 : vector<16x16xf32>
    %227 = math.exp %226 : vector<16x16xf32>
    %cst_61 = arith.constant dense<0.000000e+00> : vector<16xf32>
    %228 = vector.multi_reduction <add>, %227, %cst_61 [1] : vector<16x16xf32> to vector<16xf32>
    %229 = vector.shape_cast %228 : vector<16xf32> to vector<16x1xf32>
    %230 = tpu.reciprocal %229 {approx = true} : vector<16x1xf32> -> vector<16x1xf32>
    %231 = vector.broadcast %230 : vector<16x1xf32> to vector<16x16xf32>
    %232 = arith.mulf %227, %231 : vector<16x16xf32>
    %cst_62 = arith.constant dense<0.000000e+00> : vector<16x8xf32>
    %233 = tpu.matmul %232, %220, %cst_62 {dimension_numbers = #tpu.dot_dimension_numbers<[1], [0], [0], [1], [0, 0, 1, 1], [], []>} : vector<16x16xf32>, vector<16x8xf32>, vector<16x8xf32> -> vector<16x8xf32>
    %234 = vector.extract_strided_slice %197 {offsets = [0, 16], sizes = [16, 8], strides = [1, 1]} : vector<16x96xf32> to vector<16x8xf32>
    %cst_63 = arith.constant 0.353553385 : f32
    %235 = vector.broadcast %cst_63 : f32 to vector<16x8xf32>
    %236 = arith.mulf %234, %235 : vector<16x8xf32>
    %237 = vector.extract_strided_slice %197 {offsets = [0, 48], sizes = [16, 8], strides = [1, 1]} : vector<16x96xf32> to vector<16x8xf32>
    %238 = vector.extract_strided_slice %197 {offsets = [0, 80], sizes = [16, 8], strides = [1, 1]} : vector<16x96xf32> to vector<16x8xf32>
    "tpu.trace_start"() <{level = 10 : i32, message = "nd,md->nm"}> : () -> ()
    %cst_64 = arith.constant dense<0.000000e+00> : vector<16x16xf32>
    %239 = tpu.matmul %236, %237, %cst_64 {dimension_numbers = #tpu.dot_dimension_numbers<[1], [1], [0], [0], [0, 0, 1, 0], [], []>} : vector<16x8xf32>, vector<16x8xf32>, vector<16x16xf32> -> vector<16x16xf32>
    "tpu.trace_stop"() : () -> ()
    %240 = arith.addf %239, %74 : vector<16x16xf32>
    %cst_65 = arith.constant dense<0xFF800000> : vector<16xf32>
    %241 = vector.multi_reduction <maximumf>, %240, %cst_65 [1] : vector<16x16xf32> to vector<16xf32>
    %242 = vector.shape_cast %241 : vector<16xf32> to vector<16x1xf32>
    %243 = vector.broadcast %242 : vector<16x1xf32> to vector<16x16xf32>
    %244 = arith.subf %240, %243 : vector<16x16xf32>
    %245 = math.exp %244 : vector<16x16xf32>
    %cst_66 = arith.constant dense<0.000000e+00> : vector<16xf32>
    %246 = vector.multi_reduction <add>, %245, %cst_66 [1] : vector<16x16xf32> to vector<16xf32>
    %247 = vector.shape_cast %246 : vector<16xf32> to vector<16x1xf32>
    %248 = tpu.reciprocal %247 {approx = true} : vector<16x1xf32> -> vector<16x1xf32>
    %249 = vector.broadcast %248 : vector<16x1xf32> to vector<16x16xf32>
    %250 = arith.mulf %245, %249 : vector<16x16xf32>
    %cst_67 = arith.constant dense<0.000000e+00> : vector<16x8xf32>
    %251 = tpu.matmul %250, %238, %cst_67 {dimension_numbers = #tpu.dot_dimension_numbers<[1], [0], [0], [1], [0, 0, 1, 1], [], []>} : vector<16x16xf32>, vector<16x8xf32>, vector<16x8xf32> -> vector<16x8xf32>
    %252 = vector.extract_strided_slice %197 {offsets = [0, 24], sizes = [16, 8], strides = [1, 1]} : vector<16x96xf32> to vector<16x8xf32>
    %cst_68 = arith.constant 0.353553385 : f32
    %253 = vector.broadcast %cst_68 : f32 to vector<16x8xf32>
    %254 = arith.mulf %252, %253 : vector<16x8xf32>
    %255 = vector.extract_strided_slice %197 {offsets = [0, 56], sizes = [16, 8], strides = [1, 1]} : vector<16x96xf32> to vector<16x8xf32>
    %256 = vector.extract_strided_slice %197 {offsets = [0, 88], sizes = [16, 8], strides = [1, 1]} : vector<16x96xf32> to vector<16x8xf32>
    "tpu.trace_start"() <{level = 10 : i32, message = "nd,md->nm"}> : () -> ()
    %cst_69 = arith.constant dense<0.000000e+00> : vector<16x16xf32>
    %257 = tpu.matmul %254, %255, %cst_69 {dimension_numbers = #tpu.dot_dimension_numbers<[1], [1], [0], [0], [0, 0, 1, 0], [], []>} : vector<16x8xf32>, vector<16x8xf32>, vector<16x16xf32> -> vector<16x16xf32>
    "tpu.trace_stop"() : () -> ()
    %258 = arith.addf %257, %74 : vector<16x16xf32>
    %cst_70 = arith.constant dense<0xFF800000> : vector<16xf32>
    %259 = vector.multi_reduction <maximumf>, %258, %cst_70 [1] : vector<16x16xf32> to vector<16xf32>
    %260 = vector.shape_cast %259 : vector<16xf32> to vector<16x1xf32>
    %261 = vector.broadcast %260 : vector<16x1xf32> to vector<16x16xf32>
    %262 = arith.subf %258, %261 : vector<16x16xf32>
    %263 = math.exp %262 : vector<16x16xf32>
    %cst_71 = arith.constant dense<0.000000e+00> : vector<16xf32>
    %264 = vector.multi_reduction <add>, %263, %cst_71 [1] : vector<16x16xf32> to vector<16xf32>
    %265 = vector.shape_cast %264 : vector<16xf32> to vector<16x1xf32>
    %266 = tpu.reciprocal %265 {approx = true} : vector<16x1xf32> -> vector<16x1xf32>
    %267 = vector.broadcast %266 : vector<16x1xf32> to vector<16x16xf32>
    %268 = arith.mulf %263, %267 : vector<16x16xf32>
    %cst_72 = arith.constant dense<0.000000e+00> : vector<16x8xf32>
    %269 = tpu.matmul %268, %256, %cst_72 {dimension_numbers = #tpu.dot_dimension_numbers<[1], [0], [0], [1], [0, 0, 1, 1], [], []>} : vector<16x16xf32>, vector<16x8xf32>, vector<16x8xf32> -> vector<16x8xf32>
    %270 = tpu.concatenate %215, %233, %251, %269 in 1 : vector<16x8xf32>, vector<16x8xf32>, vector<16x8xf32>, vector<16x8xf32> -> vector<16x32xf32>
    %cst_73 = arith.constant dense<0.000000e+00> : vector<16x32xf32>
    %271 = tpu.matmul %270, %3, %cst_73 {dimension_numbers = #tpu.dot_dimension_numbers<[1], [0], [0], [1], [0, 0, 1, 1], [], []>} : vector<16x32xf32>, vector<32x32xf32>, vector<16x32xf32> -> vector<16x32xf32>
    %272 = arith.addf %271, %12 : vector<16x32xf32>
    %273 = arith.addf %195, %272 : vector<16x32xf32>
    %cst_74 = arith.constant dense<0.000000e+00> : vector<16xf32>
    %274 = vector.multi_reduction <add>, %273, %cst_74 [1] : vector<16x32xf32> to vector<16xf32>
    %275 = vector.shape_cast %274 : vector<16xf32> to vector<16x1xf32>
    %cst_75 = arith.constant 3.200000e+01 : f32
    %276 = vector.broadcast %cst_75 : f32 to vector<16x1xf32>
    %277 = arith.divf %275, %276 : vector<16x1xf32>
    %278 = vector.broadcast %277 : vector<16x1xf32> to vector<16x32xf32>
    %279 = arith.subf %273, %278 : vector<16x32xf32>
    %280 = arith.mulf %279, %279 : vector<16x32xf32>
    %cst_76 = arith.constant dense<0.000000e+00> : vector<16xf32>
    %281 = vector.multi_reduction <add>, %280, %cst_76 [1] : vector<16x32xf32> to vector<16xf32>
    %282 = vector.shape_cast %281 : vector<16xf32> to vector<16x1xf32>
    %cst_77 = arith.constant 3.200000e+01 : f32
    %283 = vector.broadcast %cst_77 : f32 to vector<16x1xf32>
    %284 = arith.divf %282, %283 : vector<16x1xf32>
    %cst_78 = arith.constant 9.99999974E-6 : f32
    %285 = vector.broadcast %cst_78 : f32 to vector<16x1xf32>
    %286 = arith.addf %284, %285 : vector<16x1xf32>
    %287 = math.rsqrt %286 : vector<16x1xf32>
    %288 = vector.broadcast %287 : vector<16x1xf32> to vector<16x32xf32>
    %289 = arith.mulf %279, %288 : vector<16x32xf32>
    %290 = arith.mulf %289, %21 : vector<16x32xf32>
    %291 = arith.addf %290, %24 : vector<16x32xf32>
    %cst_79 = arith.constant dense<0.000000e+00> : vector<16x64xf32>
    %292 = tpu.matmul %291, %4, %cst_79 {dimension_numbers = #tpu.dot_dimension_numbers<[1], [0], [0], [1], [0, 0, 1, 1], [], []>} : vector<16x32xf32>, vector<32x64xf32>, vector<16x64xf32> -> vector<16x64xf32>
    %293 = arith.addf %292, %15 : vector<16x64xf32>
    %cst_80 = arith.constant 0.000000e+00 : f32
    %294 = vector.broadcast %cst_80 : f32 to vector<16x64xf32>
    %295 = arith.maximumf %293, %294 : vector<16x64xf32>
    %cst_81 = arith.constant dense<0.000000e+00> : vector<16x32xf32>
    %296 = tpu.matmul %295, %5, %cst_81 {dimension_numbers = #tpu.dot_dimension_numbers<[1], [0], [0], [1], [0, 0, 1, 1], [], []>} : vector<16x64xf32>, vector<64x32xf32>, vector<16x32xf32> -> vector<16x32xf32>
    %297 = arith.addf %296, %18 : vector<16x32xf32>
    %298 = arith.addf %291, %297 : vector<16x32xf32>
    %cst_82 = arith.constant dense<0.000000e+00> : vector<16xf32>
    %299 = vector.multi_reduction <add>, %298, %cst_82 [1] : vector<16x32xf32> to vector<16xf32>
    %300 = vector.shape_cast %299 : vector<16xf32> to vector<16x1xf32>
    %cst_83 = arith.constant 3.200000e+01 : f32
    %301 = vector.broadcast %cst_83 : f32 to vector<16x1xf32>
    %302 = arith.divf %300, %301 : vector<16x1xf32>
    %303 = vector.broadcast %302 : vector<16x1xf32> to vector<16x32xf32>
    %304 = arith.subf %298, %303 : vector<16x32xf32>
    %305 = arith.mulf %304, %304 : vector<16x32xf32>
    %cst_84 = arith.constant dense<0.000000e+00> : vector<16xf32>
    %306 = vector.multi_reduction <add>, %305, %cst_84 [1] : vector<16x32xf32> to vector<16xf32>
    %307 = vector.shape_cast %306 : vector<16xf32> to vector<16x1xf32>
    %cst_85 = arith.constant 3.200000e+01 : f32
    %308 = vector.broadcast %cst_85 : f32 to vector<16x1xf32>
    %309 = arith.divf %307, %308 : vector<16x1xf32>
    %cst_86 = arith.constant 9.99999974E-6 : f32
    %310 = vector.broadcast %cst_86 : f32 to vector<16x1xf32>
    %311 = arith.addf %309, %310 : vector<16x1xf32>
    %312 = math.rsqrt %311 : vector<16x1xf32>
    %313 = vector.broadcast %312 : vector<16x1xf32> to vector<16x32xf32>
    %314 = arith.mulf %304, %313 : vector<16x32xf32>
    %315 = arith.mulf %314, %27 : vector<16x32xf32>
    %316 = arith.addf %315, %30 : vector<16x32xf32>
    %cst_87 = arith.constant dense<0.000000e+00> : vector<16x96xf32>
    %317 = tpu.matmul %316, %2, %cst_87 {dimension_numbers = #tpu.dot_dimension_numbers<[1], [0], [0], [1], [0, 0, 1, 1], [], []>} : vector<16x32xf32>, vector<32x96xf32>, vector<16x96xf32> -> vector<16x96xf32>
    %318 = arith.addf %317, %9 : vector<16x96xf32>
    %319 = vector.extract_strided_slice %318 {offsets = [0, 0], sizes = [16, 8], strides = [1, 1]} : vector<16x96xf32> to vector<16x8xf32>
    %cst_88 = arith.constant 0.353553385 : f32
    %320 = vector.broadcast %cst_88 : f32 to vector<16x8xf32>
    %321 = arith.mulf %319, %320 : vector<16x8xf32>
    %322 = vector.extract_strided_slice %318 {offsets = [0, 32], sizes = [16, 8], strides = [1, 1]} : vector<16x96xf32> to vector<16x8xf32>
    %323 = vector.extract_strided_slice %318 {offsets = [0, 64], sizes = [16, 8], strides = [1, 1]} : vector<16x96xf32> to vector<16x8xf32>
    "tpu.trace_start"() <{level = 10 : i32, message = "nd,md->nm"}> : () -> ()
    %cst_89 = arith.constant dense<0.000000e+00> : vector<16x16xf32>
    %324 = tpu.matmul %321, %322, %cst_89 {dimension_numbers = #tpu.dot_dimension_numbers<[1], [1], [0], [0], [0, 0, 1, 0], [], []>} : vector<16x8xf32>, vector<16x8xf32>, vector<16x16xf32> -> vector<16x16xf32>
    "tpu.trace_stop"() : () -> ()
    %325 = arith.addf %324, %74 : vector<16x16xf32>
    %cst_90 = arith.constant dense<0xFF800000> : vector<16xf32>
    %326 = vector.multi_reduction <maximumf>, %325, %cst_90 [1] : vector<16x16xf32> to vector<16xf32>
    %327 = vector.shape_cast %326 : vector<16xf32> to vector<16x1xf32>
    %328 = vector.broadcast %327 : vector<16x1xf32> to vector<16x16xf32>
    %329 = arith.subf %325, %328 : vector<16x16xf32>
    %330 = math.exp %329 : vector<16x16xf32>
    %cst_91 = arith.constant dense<0.000000e+00> : vector<16xf32>
    %331 = vector.multi_reduction <add>, %330, %cst_91 [1] : vector<16x16xf32> to vector<16xf32>
    %332 = vector.shape_cast %331 : vector<16xf32> to vector<16x1xf32>
    %333 = tpu.reciprocal %332 {approx = true} : vector<16x1xf32> -> vector<16x1xf32>
    %334 = vector.broadcast %333 : vector<16x1xf32> to vector<16x16xf32>
    %335 = arith.mulf %330, %334 : vector<16x16xf32>
    %cst_92 = arith.constant dense<0.000000e+00> : vector<16x8xf32>
    %336 = tpu.matmul %335, %323, %cst_92 {dimension_numbers = #tpu.dot_dimension_numbers<[1], [0], [0], [1], [0, 0, 1, 1], [], []>} : vector<16x16xf32>, vector<16x8xf32>, vector<16x8xf32> -> vector<16x8xf32>
    %337 = vector.extract_strided_slice %318 {offsets = [0, 8], sizes = [16, 8], strides = [1, 1]} : vector<16x96xf32> to vector<16x8xf32>
    %cst_93 = arith.constant 0.353553385 : f32
    %338 = vector.broadcast %cst_93 : f32 to vector<16x8xf32>
    %339 = arith.mulf %337, %338 : vector<16x8xf32>
    %340 = vector.extract_strided_slice %318 {offsets = [0, 40], sizes = [16, 8], strides = [1, 1]} : vector<16x96xf32> to vector<16x8xf32>
    %341 = vector.extract_strided_slice %318 {offsets = [0, 72], sizes = [16, 8], strides = [1, 1]} : vector<16x96xf32> to vector<16x8xf32>
    "tpu.trace_start"() <{level = 10 : i32, message = "nd,md->nm"}> : () -> ()
    %cst_94 = arith.constant dense<0.000000e+00> : vector<16x16xf32>
    %342 = tpu.matmul %339, %340, %cst_94 {dimension_numbers = #tpu.dot_dimension_numbers<[1], [1], [0], [0], [0, 0, 1, 0], [], []>} : vector<16x8xf32>, vector<16x8xf32>, vector<16x16xf32> -> vector<16x16xf32>
    "tpu.trace_stop"() : () -> ()
    %343 = arith.addf %342, %74 : vector<16x16xf32>
    %cst_95 = arith.constant dense<0xFF800000> : vector<16xf32>
    %344 = vector.multi_reduction <maximumf>, %343, %cst_95 [1] : vector<16x16xf32> to vector<16xf32>
    %345 = vector.shape_cast %344 : vector<16xf32> to vector<16x1xf32>
    %346 = vector.broadcast %345 : vector<16x1xf32> to vector<16x16xf32>
    %347 = arith.subf %343, %346 : vector<16x16xf32>
    %348 = math.exp %347 : vector<16x16xf32>
    %cst_96 = arith.constant dense<0.000000e+00> : vector<16xf32>
    %349 = vector.multi_reduction <add>, %348, %cst_96 [1] : vector<16x16xf32> to vector<16xf32>
    %350 = vector.shape_cast %349 : vector<16xf32> to vector<16x1xf32>
    %351 = tpu.reciprocal %350 {approx = true} : vector<16x1xf32> -> vector<16x1xf32>
    %352 = vector.broadcast %351 : vector<16x1xf32> to vector<16x16xf32>
    %353 = arith.mulf %348, %352 : vector<16x16xf32>
    %cst_97 = arith.constant dense<0.000000e+00> : vector<16x8xf32>
    %354 = tpu.matmul %353, %341, %cst_97 {dimension_numbers = #tpu.dot_dimension_numbers<[1], [0], [0], [1], [0, 0, 1, 1], [], []>} : vector<16x16xf32>, vector<16x8xf32>, vector<16x8xf32> -> vector<16x8xf32>
    %355 = vector.extract_strided_slice %318 {offsets = [0, 16], sizes = [16, 8], strides = [1, 1]} : vector<16x96xf32> to vector<16x8xf32>
    %cst_98 = arith.constant 0.353553385 : f32
    %356 = vector.broadcast %cst_98 : f32 to vector<16x8xf32>
    %357 = arith.mulf %355, %356 : vector<16x8xf32>
    %358 = vector.extract_strided_slice %318 {offsets = [0, 48], sizes = [16, 8], strides = [1, 1]} : vector<16x96xf32> to vector<16x8xf32>
    %359 = vector.extract_strided_slice %318 {offsets = [0, 80], sizes = [16, 8], strides = [1, 1]} : vector<16x96xf32> to vector<16x8xf32>
    "tpu.trace_start"() <{level = 10 : i32, message = "nd,md->nm"}> : () -> ()
    %cst_99 = arith.constant dense<0.000000e+00> : vector<16x16xf32>
    %360 = tpu.matmul %357, %358, %cst_99 {dimension_numbers = #tpu.dot_dimension_numbers<[1], [1], [0], [0], [0, 0, 1, 0], [], []>} : vector<16x8xf32>, vector<16x8xf32>, vector<16x16xf32> -> vector<16x16xf32>
    "tpu.trace_stop"() : () -> ()
    %361 = arith.addf %360, %74 : vector<16x16xf32>
    %cst_100 = arith.constant dense<0xFF800000> : vector<16xf32>
    %362 = vector.multi_reduction <maximumf>, %361, %cst_100 [1] : vector<16x16xf32> to vector<16xf32>
    %363 = vector.shape_cast %362 : vector<16xf32> to vector<16x1xf32>
    %364 = vector.broadcast %363 : vector<16x1xf32> to vector<16x16xf32>
    %365 = arith.subf %361, %364 : vector<16x16xf32>
    %366 = math.exp %365 : vector<16x16xf32>
    %cst_101 = arith.constant dense<0.000000e+00> : vector<16xf32>
    %367 = vector.multi_reduction <add>, %366, %cst_101 [1] : vector<16x16xf32> to vector<16xf32>
    %368 = vector.shape_cast %367 : vector<16xf32> to vector<16x1xf32>
    %369 = tpu.reciprocal %368 {approx = true} : vector<16x1xf32> -> vector<16x1xf32>
    %370 = vector.broadcast %369 : vector<16x1xf32> to vector<16x16xf32>
    %371 = arith.mulf %366, %370 : vector<16x16xf32>
    %cst_102 = arith.constant dense<0.000000e+00> : vector<16x8xf32>
    %372 = tpu.matmul %371, %359, %cst_102 {dimension_numbers = #tpu.dot_dimension_numbers<[1], [0], [0], [1], [0, 0, 1, 1], [], []>} : vector<16x16xf32>, vector<16x8xf32>, vector<16x8xf32> -> vector<16x8xf32>
    %373 = vector.extract_strided_slice %318 {offsets = [0, 24], sizes = [16, 8], strides = [1, 1]} : vector<16x96xf32> to vector<16x8xf32>
    %cst_103 = arith.constant 0.353553385 : f32
    %374 = vector.broadcast %cst_103 : f32 to vector<16x8xf32>
    %375 = arith.mulf %373, %374 : vector<16x8xf32>
    %376 = vector.extract_strided_slice %318 {offsets = [0, 56], sizes = [16, 8], strides = [1, 1]} : vector<16x96xf32> to vector<16x8xf32>
    %377 = vector.extract_strided_slice %318 {offsets = [0, 88], sizes = [16, 8], strides = [1, 1]} : vector<16x96xf32> to vector<16x8xf32>
    "tpu.trace_start"() <{level = 10 : i32, message = "nd,md->nm"}> : () -> ()
    %cst_104 = arith.constant dense<0.000000e+00> : vector<16x16xf32>
    %378 = tpu.matmul %375, %376, %cst_104 {dimension_numbers = #tpu.dot_dimension_numbers<[1], [1], [0], [0], [0, 0, 1, 0], [], []>} : vector<16x8xf32>, vector<16x8xf32>, vector<16x16xf32> -> vector<16x16xf32>
    "tpu.trace_stop"() : () -> ()
    %379 = arith.addf %378, %74 : vector<16x16xf32>
    %cst_105 = arith.constant dense<0xFF800000> : vector<16xf32>
    %380 = vector.multi_reduction <maximumf>, %379, %cst_105 [1] : vector<16x16xf32> to vector<16xf32>
    %381 = vector.shape_cast %380 : vector<16xf32> to vector<16x1xf32>
    %382 = vector.broadcast %381 : vector<16x1xf32> to vector<16x16xf32>
    %383 = arith.subf %379, %382 : vector<16x16xf32>
    %384 = math.exp %383 : vector<16x16xf32>
    %cst_106 = arith.constant dense<0.000000e+00> : vector<16xf32>
    %385 = vector.multi_reduction <add>, %384, %cst_106 [1] : vector<16x16xf32> to vector<16xf32>
    %386 = vector.shape_cast %385 : vector<16xf32> to vector<16x1xf32>
    %387 = tpu.reciprocal %386 {approx = true} : vector<16x1xf32> -> vector<16x1xf32>
    %388 = vector.broadcast %387 : vector<16x1xf32> to vector<16x16xf32>
    %389 = arith.mulf %384, %388 : vector<16x16xf32>
    %cst_107 = arith.constant dense<0.000000e+00> : vector<16x8xf32>
    %390 = tpu.matmul %389, %377, %cst_107 {dimension_numbers = #tpu.dot_dimension_numbers<[1], [0], [0], [1], [0, 0, 1, 1], [], []>} : vector<16x16xf32>, vector<16x8xf32>, vector<16x8xf32> -> vector<16x8xf32>
    %391 = tpu.concatenate %336, %354, %372, %390 in 1 : vector<16x8xf32>, vector<16x8xf32>, vector<16x8xf32>, vector<16x8xf32> -> vector<16x32xf32>
    %cst_108 = arith.constant dense<0.000000e+00> : vector<16x32xf32>
    %392 = tpu.matmul %391, %3, %cst_108 {dimension_numbers = #tpu.dot_dimension_numbers<[1], [0], [0], [1], [0, 0, 1, 1], [], []>} : vector<16x32xf32>, vector<32x32xf32>, vector<16x32xf32> -> vector<16x32xf32>
    %393 = arith.addf %392, %12 : vector<16x32xf32>
    %394 = arith.addf %316, %393 : vector<16x32xf32>
    %cst_109 = arith.constant dense<0.000000e+00> : vector<16xf32>
    %395 = vector.multi_reduction <add>, %394, %cst_109 [1] : vector<16x32xf32> to vector<16xf32>
    %396 = vector.shape_cast %395 : vector<16xf32> to vector<16x1xf32>
    %cst_110 = arith.constant 3.200000e+01 : f32
    %397 = vector.broadcast %cst_110 : f32 to vector<16x1xf32>
    %398 = arith.divf %396, %397 : vector<16x1xf32>
    %399 = vector.broadcast %398 : vector<16x1xf32> to vector<16x32xf32>
    %400 = arith.subf %394, %399 : vector<16x32xf32>
    %401 = arith.mulf %400, %400 : vector<16x32xf32>
    %cst_111 = arith.constant dense<0.000000e+00> : vector<16xf32>
    %402 = vector.multi_reduction <add>, %401, %cst_111 [1] : vector<16x32xf32> to vector<16xf32>
    %403 = vector.shape_cast %402 : vector<16xf32> to vector<16x1xf32>
    %cst_112 = arith.constant 3.200000e+01 : f32
    %404 = vector.broadcast %cst_112 : f32 to vector<16x1xf32>
    %405 = arith.divf %403, %404 : vector<16x1xf32>
    %cst_113 = arith.constant 9.99999974E-6 : f32
    %406 = vector.broadcast %cst_113 : f32 to vector<16x1xf32>
    %407 = arith.addf %405, %406 : vector<16x1xf32>
    %408 = math.rsqrt %407 : vector<16x1xf32>
    %409 = vector.broadcast %408 : vector<16x1xf32> to vector<16x32xf32>
    %410 = arith.mulf %400, %409 : vector<16x32xf32>
    %411 = arith.mulf %410, %21 : vector<16x32xf32>
    %412 = arith.addf %411, %24 : vector<16x32xf32>
    %cst_114 = arith.constant dense<0.000000e+00> : vector<16x64xf32>
    %413 = tpu.matmul %412, %4, %cst_114 {dimension_numbers = #tpu.dot_dimension_numbers<[1], [0], [0], [1], [0, 0, 1, 1], [], []>} : vector<16x32xf32>, vector<32x64xf32>, vector<16x64xf32> -> vector<16x64xf32>
    %414 = arith.addf %413, %15 : vector<16x64xf32>
    %cst_115 = arith.constant 0.000000e+00 : f32
    %415 = vector.broadcast %cst_115 : f32 to vector<16x64xf32>
    %416 = arith.maximumf %414, %415 : vector<16x64xf32>
    %cst_116 = arith.constant dense<0.000000e+00> : vector<16x32xf32>
    %417 = tpu.matmul %416, %5, %cst_116 {dimension_numbers = #tpu.dot_dimension_numbers<[1], [0], [0], [1], [0, 0, 1, 1], [], []>} : vector<16x64xf32>, vector<64x32xf32>, vector<16x32xf32> -> vector<16x32xf32>
    %418 = arith.addf %417, %18 : vector<16x32xf32>
    %419 = arith.addf %412, %418 : vector<16x32xf32>
    %cst_117 = arith.constant dense<0.000000e+00> : vector<16xf32>
    %420 = vector.multi_reduction <add>, %419, %cst_117 [1] : vector<16x32xf32> to vector<16xf32>
    %421 = vector.shape_cast %420 : vector<16xf32> to vector<16x1xf32>
    %cst_118 = arith.constant 3.200000e+01 : f32
    %422 = vector.broadcast %cst_118 : f32 to vector<16x1xf32>
    %423 = arith.divf %421, %422 : vector<16x1xf32>
    %424 = vector.broadcast %423 : vector<16x1xf32> to vector<16x32xf32>
    %425 = arith.subf %419, %424 : vector<16x32xf32>
    %426 = arith.mulf %425, %425 : vector<16x32xf32>
    %cst_119 = arith.constant dense<0.000000e+00> : vector<16xf32>
    %427 = vector.multi_reduction <add>, %426, %cst_119 [1] : vector<16x32xf32> to vector<16xf32>
    %428 = vector.shape_cast %427 : vector<16xf32> to vector<16x1xf32>
    %cst_120 = arith.constant 3.200000e+01 : f32
    %429 = vector.broadcast %cst_120 : f32 to vector<16x1xf32>
    %430 = arith.divf %428, %429 : vector<16x1xf32>
    %cst_121 = arith.constant 9.99999974E-6 : f32
    %431 = vector.broadcast %cst_121 : f32 to vector<16x1xf32>
    %432 = arith.addf %430, %431 : vector<16x1xf32>
    %433 = math.rsqrt %432 : vector<16x1xf32>
    %434 = vector.broadcast %433 : vector<16x1xf32> to vector<16x32xf32>
    %435 = arith.mulf %425, %434 : vector<16x32xf32>
    %436 = arith.mulf %435, %27 : vector<16x32xf32>
    %437 = arith.addf %436, %30 : vector<16x32xf32>
    %cst_122 = arith.constant dense<0.000000e+00> : vector<16xf32>
    %438 = vector.multi_reduction <add>, %437, %cst_122 [1] : vector<16x32xf32> to vector<16xf32>
    %439 = vector.shape_cast %438 : vector<16xf32> to vector<16x1xf32>
    %cst_123 = arith.constant 3.200000e+01 : f32
    %440 = vector.broadcast %cst_123 : f32 to vector<16x1xf32>
    %441 = arith.divf %439, %440 : vector<16x1xf32>
    %442 = vector.broadcast %441 : vector<16x1xf32> to vector<16x32xf32>
    %443 = arith.subf %437, %442 : vector<16x32xf32>
    %444 = arith.mulf %443, %443 : vector<16x32xf32>
    %cst_124 = arith.constant dense<0.000000e+00> : vector<16xf32>
    %445 = vector.multi_reduction <add>, %444, %cst_124 [1] : vector<16x32xf32> to vector<16xf32>
    %446 = vector.shape_cast %445 : vector<16xf32> to vector<16x1xf32>
    %cst_125 = arith.constant 3.200000e+01 : f32
    %447 = vector.broadcast %cst_125 : f32 to vector<16x1xf32>
    %448 = arith.divf %446, %447 : vector<16x1xf32>
    %cst_126 = arith.constant 9.99999974E-6 : f32
    %449 = vector.broadcast %cst_126 : f32 to vector<16x1xf32>
    %450 = arith.addf %448, %449 : vector<16x1xf32>
    %451 = math.rsqrt %450 : vector<16x1xf32>
    %452 = vector.broadcast %451 : vector<16x1xf32> to vector<16x32xf32>
    %453 = arith.mulf %443, %452 : vector<16x32xf32>
    %454 = arith.mulf %453, %33 : vector<16x32xf32>
    %455 = arith.addf %454, %36 : vector<16x32xf32>
    %c0_127 = arith.constant 0 : index
    %c0_128 = arith.constant 0 : index
    %456 = vector.load %arg4[%c0_127, %c0_128] : memref<16x32xf32, #tpu.memory_space<vmem>>, vector<16x32xf32>
    tpu.vector_store %arg4[%c0_127, %c0_128], %455 {strides = array<i32>} : memref<16x32xf32, #tpu.memory_space<vmem>>, vector<16x32xf32>,
    return
  }
}

</mosaic_0001>

<llo_original>
// kernel: universal_transformer_encoder.1
$region0: #{universal_transformer_encoder.1}
  #allocation0 [shape = 'u32[]', space=smem, size = 0x4, offset = 0x4, fixed_abs, tag = 'smem constant byte address 0x4 - core index']
  #allocation1 [shape = 'u32[72,128]{1,0:T(1,128)}', space=vmem, size = 0x9000, scoped, tag = 'internal scratch']
  %s0 = inlined_call_operand.hbm [shape: f32[16,32], index: 0, kind: input, shape index: {}]
  %s1 = inlined_call_operand.vmem [shape: f32[32,384], index: 1, kind: input, shape index: {}]
  %s2 = inlined_call_operand.vmem [shape: f32[64,32], index: 2, kind: input, shape index: {}]
  %s3 = inlined_call_operand.hbm [shape: f32[10,128], index: 3, kind: input, shape index: {}]
  %s4 = inlined_call_operand.hbm [shape: f32[16,32], index: 4, kind: output, shape index: {}]
  %s5 = sld [smem:[#allocation0]]
  $region34: #{universal_transformer_encoder.1} parent=0
    _
  %s7 = ssub.s32 1, %s5
  %s8 = scalar_select 0, %s7, %s5
  $region1: #{universal_transformer_encoder.1} parent=0
    #allocation2 [shape = 'u8[8192]{0}', space=vmem, size = 0x2000, scoped, tag = 'input window, operand 0, single buffered']
    #allocation3 [shape = 's32[1]{0}', space=sflag, size = 0x4, scoped, tag = 'scoped memory for universal_transformer_encoder.1']
    #allocation4 [shape = 's32[1]{0}', space=sflag, size = 0x4, scoped, tag = 'scoped memory for universal_transformer_encoder.1']
    #allocation5 [shape = 'u8[8192]{0}', space=vmem, size = 0x2000, scoped, tag = 'input window, operand 3, single buffered']
    #allocation6 [shape = 's32[1]{0}', space=sflag, size = 0x4, scoped, tag = 'scoped memory for universal_transformer_encoder.1']
    #allocation7 [shape = 'u8[8192]{0}', space=vmem, size = 0x2000, scoped, tag = 'output window, operand 0, single buffered']
    %9 = vsyncpa [#allocation3], 0
    %10 = vsyncpa [#allocation6], 0
    %11 = vsyncpa [#allocation4], 0
    // Predicated region
    $region2: #{universal_transformer_encoder.1} parent=1 // pred_check
      _
    $region3: #{universal_transformer_encoder.1} parent=1 // pred_check_branch
      %13 = sbr.rel (0) target = $region5
    $region4: #{universal_transformer_encoder.1} parent=1 // pred_region
      %15 = vsyncadd [#allocation3], 0
      %s16 = sshll.u32 %s0, 4
      %s17 = int_to_ptr.hbm [resolvable:$true] %s16
      %s18 = sshll.u32 [#allocation2], 4
      %s19 = int_to_ptr.vmem [resolvable:$true] %s18
      %24 = dma.hbm_to_vmem [thread:$0]  %s17, 256, %s19, [#allocation3], 128, 128, 8
    $region5: #{universal_transformer_encoder.1} parent=1 // pred_fallthru
      _
    // Predicated region
    $region6: #{universal_transformer_encoder.1} parent=1 // pred_check
      _
    $region7: #{universal_transformer_encoder.1} parent=1 // pred_check_branch
      %26 = sbr.rel (0) target = $region9
    $region8: #{universal_transformer_encoder.1} parent=1 // pred_region
      _
    $region9: #{universal_transformer_encoder.1} parent=1 // pred_fallthru
      _
    // Predicated region
    $region10: #{universal_transformer_encoder.1} parent=1 // pred_check
      _
    $region11: #{universal_transformer_encoder.1} parent=1 // pred_check_branch
      %28 = sbr.rel (0) target = $region13
    $region12: #{universal_transformer_encoder.1} parent=1 // pred_region
      _
    $region13: #{universal_transformer_encoder.1} parent=1 // pred_fallthru
      _
    // Predicated region
    $region14: #{universal_transformer_encoder.1} parent=1 // pred_check
      _
    $region15: #{universal_transformer_encoder.1} parent=1 // pred_check_branch
      %30 = sbr.rel (0) target = $region17
    $region16: #{universal_transformer_encoder.1} parent=1 // pred_region
      %32 = vsyncadd [#allocation6], 0
      %s33 = sshll.u32 %s3, 4
      %s34 = int_to_ptr.hbm [resolvable:$true] %s33
      %s35 = sshll.u32 [#allocation5], 4
      %s36 = int_to_ptr.vmem [resolvable:$true] %s35
      %41 = dma.hbm_to_vmem [thread:$0]  %s34, 256, %s36, [#allocation6], 128, 128, 8
    $region17: #{universal_transformer_encoder.1} parent=1 // pred_fallthru
      _
    // Predicated region
    $region18: #{universal_transformer_encoder.1} parent=1 // pred_check
      _
    $region19: #{universal_transformer_encoder.1} parent=1 // pred_check_branch
      %43 = sbr.rel (0) target = $region21
    $region20: #{universal_transformer_encoder.1} parent=1 // pred_region
      %45 = dma.done [#allocation3], 256
    $region21: #{universal_transformer_encoder.1} parent=1 // pred_fallthru
      _
    // Predicated region
    $region22: #{universal_transformer_encoder.1} parent=1 // pred_check
      _
    $region23: #{universal_transformer_encoder.1} parent=1 // pred_check_branch
      %47 = sbr.rel (0) target = $region25
    $region24: #{universal_transformer_encoder.1} parent=1 // pred_region
      %49 = dma.done [#allocation6], 256
    $region25: #{universal_transformer_encoder.1} parent=1 // pred_fallthru
      _
    %v50 = vld [vmem:[#allocation2] sm:$0xff]
    %v51 = vld [vmem:[#allocation2 + $0x8] sm:$0xff]
    %v52 = vld [vmem:[%s1] sm:$0xff]
    %v53 = vld [vmem:[%s1 + $0x8] sm:$0xff]
    %v54 = vld [vmem:[%s1 + $0x10] sm:$0xff]
    %v55 = vld [vmem:[%s1 + $0x18] sm:$0xff]
    %v56 = vld [vmem:[%s1 + $0x20] sm:$0xff]
    %v57 = vld [vmem:[%s1 + $0x28] sm:$0xff]
    %v58 = vld [vmem:[%s1 + $0x30] sm:$0xff]
    %v59 = vld [vmem:[%s1 + $0x38] sm:$0xff]
    %v60 = vld [vmem:[%s1 + $0x40] sm:$0xff]
    %v61 = vld [vmem:[%s1 + $0x48] sm:$0xff]
    %v62 = vld [vmem:[%s1 + $0x50] sm:$0xff]
    %v63 = vld [vmem:[%s1 + $0x58] sm:$0xff]
    %v64 = vld [vmem:[%s2] sm:$0xff]
    %v65 = vld [vmem:[%s2 + $0x8] sm:$0xff]
    %v66 = vld [vmem:[%s2 + $0x10] sm:$0xff]
    %v67 = vld [vmem:[%s2 + $0x18] sm:$0xff]
    %v68 = vld [vmem:[%s2 + $0x20] sm:$0xff]
    %v69 = vld [vmem:[%s2 + $0x28] sm:$0xff]
    %v70 = vld [vmem:[%s2 + $0x30] sm:$0xff]
    %v71 = vld [vmem:[%s2 + $0x38] sm:$0xff]
    %v72 = vld [vmem:[#allocation5] sm:$0xff]
    %v73 = vld [vmem:[#allocation5 + $0x8] sm:$0x3]
    %v74 = vperm.slane %v72, 0
    %v75 = vperm.slane %v72, 1
    %v76 = vperm.slane %v72, 2
    %v77 = vperm.slane %v72, 3
    %v78 = vperm.slane %v72, 4
    %v79 = vperm.slane %v72, 5
    %v80 = vperm.slane %v72, 6
    %v81 = vperm.slane %v72, 7
    %v82 = vperm.slane %v73, 0
    %v83 = vperm.slane %v73, 1
    %v84 = vlaneseq
    %v85 = vshrl.u32 %v84, 7
    %v86 = vadd.s32 %v85, 8
    %v87 = vlaneseq
    %v88 = vand.u32 %v87, 127
    %vm89 = vcmp.lt.s32.totalorder %v85, 0
    %v90 = vsub.s32 0, %v85
    %v91 = vsel %vm89, %v90, %v85
    %v92 = vshrl.u32 %v91, 1
    %v93 = vand.u32 %v91, 1
    %v94 = vsub.s32 0, %v93
    %v95 = vsel %vm89, %v94, %v93
    %vm96 = vcmp.lt.s32.totalorder %v86, 0
    %v97 = vsub.s32 0, %v86
    %v98 = vsel %vm96, %v97, %v86
    %v99 = vshrl.u32 %v98, 1
    %v100 = vand.u32 %v98, 1
    %v101 = vsub.s32 0, %v100
    %v102 = vsel %vm96, %v101, %v100
    %vm103 = vcmp.ne.s32.totalorder %v95, 0
    %vm104 = vcmp.ne.s32.totalorder %v102, 0
    %vm105 = vcmp.lt.s32.totalorder %v95, 0
    %vm106 = vcmp.lt.s32.totalorder %v102, 0
    %vm107 = vmand %vm105, %vm103
    %vm108 = vmand %vm106, %vm104
    %v109 = vadd.s32 %v95, 2
    %v110 = vadd.s32 %v102, 2
    %v111 = vsel %vm107, %v109, %v95
    %v112 = vsel %vm108, %v110, %v102
    %vm113 = vcmp.lt.s32.totalorder %v88, 0
    %v114 = vsub.s32 0, %v88
    %v115 = vsel %vm113, %v114, %v88
    %v116 = vshrl.u32 %v115, 1
    %v117 = vand.u32 %v115, 1
    %v118 = vsub.s32 0, %v117
    %v119 = vsel %vm113, %v118, %v117
    %vm120 = vcmp.ne.s32.totalorder %v119, 0
    %vm121 = vcmp.lt.s32.totalorder %v119, 0
    %vm122 = vmand %vm121, %vm120
    %v123 = vadd.s32 %v119, 2
    %v124 = vsel %vm122, %v123, %v119
    %vm125 = vcmp.eq.s32.totalorder %v111, %v124
    %vm126 = vcmp.eq.s32.totalorder %v112, %v124
    %v127 = vsel %vm125, 0.0, -1e+30
    %v128 = vsel %vm126, 0.0, -1e+30
    %vm129 = vcmask 261120
    %v131 = vsel %vm129, %v50, 0
    %v134 = vsel %vm129, %v51, 0
    %136 = vmatpush.msra.mxu0 0.0
    %137 = vmatpush.msra.mxu0 0.0
    %138 = vmatpush.msra.mxu0 0.0
    %139 = vmatpush.msra.mxu0 0.0
    %140 = vmatpush.msra.mxu0 0.0
    %141 = vmatpush.msra.mxu0 0.0
    %142 = vmatpush.msra.mxu0 0.0
    %143 = vmatpush.msra.mxu0 0.0
    %144 = vmatpush.msra.mxu0 0.0
    %145 = vmatpush.msra.mxu0 0.0
    %146 = vmatpush.msra.mxu0 0.0
    %147 = vmatpush.msra.mxu0 0.0
    %148 = vmatpush.msra.mxu0 %v61
    %149 = vmatpush.msra.mxu0 %v58
    %150 = vmatpush.msra.mxu0 %v55
    %151 = vmatpush.msra.mxu0 %v52
    %152 = vmatmul.f32.gmra.mxu0 %v131
    %v153 = vpop.f32.mrf.mxu0
    %v154 = vadd.f32 %v74, %v153
    %155 = vmatmul.f32.gmra.mxu0 %v134
    %v156 = vpop.f32.mrf.mxu0
    %v157 = vadd.f32 %v74, %v156
    %158 = vdwg.mxu0
    %v159 = vmul.f32 %v154, 0.35355338
    %v160 = vmul.f32 %v157, 0.35355338
    %163 = vrot.lane.b32.xlu0 %v154, 96
    %v164 = vpop.permute.xlu0 %163
    %165 = vrot.lane.b32.xlu0 %v157, 96
    %v166 = vpop.permute.xlu0 %165
    %vm167 = vcmask 64512
    %v169 = vsel %vm167, %v159, 0
    %v172 = vsel %vm167, %v160, 0
    %v174 = vsel %vm167, %v164, 0
    %v176 = vsel %vm167, %v166, 0
    %178 = vmatpush.xpose.msra.mxu0 0.0
    %179 = vmatpush.xpose.msra.mxu0 0.0
    %180 = vmatpush.xpose.msra.mxu0 0.0
    %181 = vmatpush.xpose.msra.mxu0 0.0
    %182 = vmatpush.xpose.msra.mxu0 0.0
    %183 = vmatpush.xpose.msra.mxu0 0.0
    %184 = vmatpush.xpose.msra.mxu0 0.0
    %185 = vmatpush.xpose.msra.mxu0 0.0
    %186 = vmatpush.xpose.msra.mxu0 0.0
    %187 = vmatpush.xpose.msra.mxu0 0.0
    %188 = vmatpush.xpose.msra.mxu0 0.0
    %189 = vmatpush.xpose.msra.mxu0 0.0
    %190 = vmatpush.xpose.msra.mxu0 0.0
    %191 = vmatpush.xpose.msra.mxu0 0.0
    %192 = vmatpush.xpose.msra.mxu0 %v176
    %193 = vmatpush.xpose.msra.mxu0 %v174
    %194 = vmatmul.f32.gmra.mxu0 %v169
    %v195 = vpop.f32.mrf.mxu0
    %v196 = vadd.f32 %v127, %v195
    %197 = vmatmul.f32.gmra.mxu0 %v172
    %v198 = vpop.f32.mrf.mxu0
    %v199 = vadd.f32 %v128, %v198
    %200 = vdwg.mxu0
    %vm201 = vcmask 130048
    %v202 = vsel %vm201, %v196, -inf
    %203 = vmax.xlane.f32.xlu0 %v202
    %v204 = vpop.xlane.xlu0 %203
    %v205 = vsel %vm201, %v199, -inf
    %206 = vmax.xlane.f32.xlu0 %v205
    %v207 = vpop.xlane.xlu0 %206
    %v208 = vsub.f32 %v196, %v204
    %v209 = vsub.f32 %v199, %v207
    %v210 = vmul.f32 %v208, 1.442695
    %v211 = vpow.pop %v210
    %v212 = vmul.f32 %v209, 1.442695
    %v213 = vpow.pop %v212
    %v214 = vsel %vm201, %v211, 0.0
    %215 = vadd.xlane.f32.xlu0 %v214
    %v216 = vpop.xlane.xlu0 %215
    %v217 = vsel %vm201, %v213, 0.0
    %218 = vadd.xlane.f32.xlu0 %v217
    %v219 = vpop.xlane.xlu0 %218
    %v220 = vrcp.pop %v216
    %v221 = vrcp.pop %v219
    %v222 = vmul.f32 %v211, %v220
    %v223 = vmul.f32 %v213, %v221
    %224 = vrot.lane.b32.xlu0 %v154, 64
    %v225 = vpop.permute.xlu0 %224
    %226 = vrot.lane.b32.xlu0 %v157, 64
    %v227 = vpop.permute.xlu0 %226
    %v231 = vsel %vm201, %v222, 0
    %v234 = vsel %vm201, %v223, 0
    %236 = vmatpush.msra.mxu0 0.0
    %237 = vmatpush.msra.mxu0 0.0
    %238 = vmatpush.msra.mxu0 0.0
    %239 = vmatpush.msra.mxu0 0.0
    %240 = vmatpush.msra.mxu0 0.0
    %241 = vmatpush.msra.mxu0 0.0
    %242 = vmatpush.msra.mxu0 0.0
    %243 = vmatpush.msra.mxu0 0.0
    %244 = vmatpush.msra.mxu0 0.0
    %245 = vmatpush.msra.mxu0 0.0
    %246 = vmatpush.msra.mxu0 0.0
    %247 = vmatpush.msra.mxu0 0.0
    %248 = vmatpush.msra.mxu0 0.0
    %249 = vmatpush.msra.mxu0 0.0
    %250 = vmatpush.msra.mxu0 %v227
    %251 = vmatpush.msra.mxu0 %v225
    %252 = vmatmul.f32.gmra.mxu0 %v231
    %v253 = vpop.f32.mrf.mxu0
    %v254 = vadd.f32 0.0, %v253
    %255 = vmatmul.f32.gmra.mxu0 %v234
    %v256 = vpop.f32.mrf.mxu0
    %v257 = vadd.f32 0.0, %v256
    %258 = vdwg.mxu0
    %259 = vrot.lane.b32.xlu0 %v159, 120
    %v260 = vpop.permute.xlu0 %259
    %261 = vrot.lane.b32.xlu0 %v160, 120
    %v262 = vpop.permute.xlu0 %261
    %263 = vrot.lane.b32.xlu0 %v154, 88
    %v264 = vpop.permute.xlu0 %263
    %265 = vrot.lane.b32.xlu0 %v157, 88
    %v266 = vpop.permute.xlu0 %265
    %v267 = vsel %vm167, %v260, 0
    %v269 = vsel %vm167, %v262, 0
    %v271 = vsel %vm167, %v264, 0
    %v273 = vsel %vm167, %v266, 0
    %275 = vmatpush.xpose.msra.mxu0 0.0
    %276 = vmatpush.xpose.msra.mxu0 0.0
    %277 = vmatpush.xpose.msra.mxu0 0.0
    %278 = vmatpush.xpose.msra.mxu0 0.0
    %279 = vmatpush.xpose.msra.mxu0 0.0
    %280 = vmatpush.xpose.msra.mxu0 0.0
    %281 = vmatpush.xpose.msra.mxu0 0.0
    %282 = vmatpush.xpose.msra.mxu0 0.0
    %283 = vmatpush.xpose.msra.mxu0 0.0
    %284 = vmatpush.xpose.msra.mxu0 0.0
    %285 = vmatpush.xpose.msra.mxu0 0.0
    %286 = vmatpush.xpose.msra.mxu0 0.0
    %287 = vmatpush.xpose.msra.mxu0 0.0
    %288 = vmatpush.xpose.msra.mxu0 0.0
    %289 = vmatpush.xpose.msra.mxu0 %v273
    %290 = vmatpush.xpose.msra.mxu0 %v271
    %291 = vmatmul.f32.gmra.mxu0 %v267
    %v292 = vpop.f32.mrf.mxu0
    %v293 = vadd.f32 %v127, %v292
    %294 = vmatmul.f32.gmra.mxu0 %v269
    %v295 = vpop.f32.mrf.mxu0
    %v296 = vadd.f32 %v128, %v295
    %297 = vdwg.mxu0
    %v298 = vsel %vm201, %v293, -inf
    %299 = vmax.xlane.f32.xlu0 %v298
    %v300 = vpop.xlane.xlu0 %299
    %v301 = vsel %vm201, %v296, -inf
    %302 = vmax.xlane.f32.xlu0 %v301
    %v303 = vpop.xlane.xlu0 %302
    %v304 = vsub.f32 %v293, %v300
    %v305 = vsub.f32 %v296, %v303
    %v306 = vmul.f32 %v304, 1.442695
    %v307 = vpow.pop %v306
    %v308 = vmul.f32 %v305, 1.442695
    %v309 = vpow.pop %v308
    %v310 = vsel %vm201, %v307, 0.0
    %311 = vadd.xlane.f32.xlu0 %v310
    %v312 = vpop.xlane.xlu0 %311
    %v313 = vsel %vm201, %v309, 0.0
    %314 = vadd.xlane.f32.xlu0 %v313
    %v315 = vpop.xlane.xlu0 %314
    %v316 = vrcp.pop %v312
    %v317 = vrcp.pop %v315
    %v318 = vmul.f32 %v307, %v316
    %v319 = vmul.f32 %v309, %v317
    %320 = vrot.lane.b32.xlu0 %v154, 56
    %v321 = vpop.permute.xlu0 %320
    %322 = vrot.lane.b32.xlu0 %v157, 56
    %v323 = vpop.permute.xlu0 %322
    %v327 = vsel %vm201, %v318, 0
    %v330 = vsel %vm201, %v319, 0
    %332 = vmatpush.msra.mxu0 0.0
    %333 = vmatpush.msra.mxu0 0.0
    %334 = vmatpush.msra.mxu0 0.0
    %335 = vmatpush.msra.mxu0 0.0
    %336 = vmatpush.msra.mxu0 0.0
    %337 = vmatpush.msra.mxu0 0.0
    %338 = vmatpush.msra.mxu0 0.0
    %339 = vmatpush.msra.mxu0 0.0
    %340 = vmatpush.msra.mxu0 0.0
    %341 = vmatpush.msra.mxu0 0.0
    %342 = vmatpush.msra.mxu0 0.0
    %343 = vmatpush.msra.mxu0 0.0
    %344 = vmatpush.msra.mxu0 0.0
    %345 = vmatpush.msra.mxu0 0.0
    %346 = vmatpush.msra.mxu0 %v323
    %347 = vmatpush.msra.mxu0 %v321
    %348 = vmatmul.f32.gmra.mxu0 %v327
    %v349 = vpop.f32.mrf.mxu0
    %v350 = vadd.f32 0.0, %v349
    %351 = vmatmul.f32.gmra.mxu0 %v330
    %v352 = vpop.f32.mrf.mxu0
    %v353 = vadd.f32 0.0, %v352
    %354 = vdwg.mxu0
    %355 = vrot.lane.b32.xlu0 %v159, 112
    %v356 = vpop.permute.xlu0 %355
    %357 = vrot.lane.b32.xlu0 %v160, 112
    %v358 = vpop.permute.xlu0 %357
    %359 = vrot.lane.b32.xlu0 %v154, 80
    %v360 = vpop.permute.xlu0 %359
    %361 = vrot.lane.b32.xlu0 %v157, 80
    %v362 = vpop.permute.xlu0 %361
    %v363 = vsel %vm167, %v356, 0
    %v365 = vsel %vm167, %v358, 0
    %v367 = vsel %vm167, %v360, 0
    %v369 = vsel %vm167, %v362, 0
    %371 = vmatpush.xpose.msra.mxu0 0.0
    %372 = vmatpush.xpose.msra.mxu0 0.0
    %373 = vmatpush.xpose.msra.mxu0 0.0
    %374 = vmatpush.xpose.msra.mxu0 0.0
    %375 = vmatpush.xpose.msra.mxu0 0.0
    %376 = vmatpush.xpose.msra.mxu0 0.0
    %377 = vmatpush.xpose.msra.mxu0 0.0
    %378 = vmatpush.xpose.msra.mxu0 0.0
    %379 = vmatpush.xpose.msra.mxu0 0.0
    %380 = vmatpush.xpose.msra.mxu0 0.0
    %381 = vmatpush.xpose.msra.mxu0 0.0
    %382 = vmatpush.xpose.msra.mxu0 0.0
    %383 = vmatpush.xpose.msra.mxu0 0.0
    %384 = vmatpush.xpose.msra.mxu0 0.0
    %385 = vmatpush.xpose.msra.mxu0 %v369
    %386 = vmatpush.xpose.msra.mxu0 %v367
    %387 = vmatmul.f32.gmra.mxu0 %v363
    %v388 = vpop.f32.mrf.mxu0
    %v389 = vadd.f32 %v127, %v388
    %390 = vmatmul.f32.gmra.mxu0 %v365
    %v391 = vpop.f32.mrf.mxu0
    %v392 = vadd.f32 %v128, %v391
    %393 = vdwg.mxu0
    %v394 = vsel %vm201, %v389, -inf
    %395 = vmax.xlane.f32.xlu0 %v394
    %v396 = vpop.xlane.xlu0 %395
    %v397 = vsel %vm201, %v392, -inf
    %398 = vmax.xlane.f32.xlu0 %v397
    %v399 = vpop.xlane.xlu0 %398
    %v400 = vsub.f32 %v389, %v396
    %v401 = vsub.f32 %v392, %v399
    %v402 = vmul.f32 %v400, 1.442695
    %v403 = vpow.pop %v402
    %v404 = vmul.f32 %v401, 1.442695
    %v405 = vpow.pop %v404
    %v406 = vsel %vm201, %v403, 0.0
    %407 = vadd.xlane.f32.xlu0 %v406
    %v408 = vpop.xlane.xlu0 %407
    %v409 = vsel %vm201, %v405, 0.0
    %410 = vadd.xlane.f32.xlu0 %v409
    %v411 = vpop.xlane.xlu0 %410
    %v412 = vrcp.pop %v408
    %v413 = vrcp.pop %v411
    %v414 = vmul.f32 %v403, %v412
    %v415 = vmul.f32 %v405, %v413
    %416 = vrot.lane.b32.xlu0 %v154, 48
    %v417 = vpop.permute.xlu0 %416
    %418 = vrot.lane.b32.xlu0 %v157, 48
    %v419 = vpop.permute.xlu0 %418
    %v423 = vsel %vm201, %v414, 0
    %v426 = vsel %vm201, %v415, 0
    %428 = vmatpush.msra.mxu0 0.0
    %429 = vmatpush.msra.mxu0 0.0
    %430 = vmatpush.msra.mxu0 0.0
    %431 = vmatpush.msra.mxu0 0.0
    %432 = vmatpush.msra.mxu0 0.0
    %433 = vmatpush.msra.mxu0 0.0
    %434 = vmatpush.msra.mxu0 0.0
    %435 = vmatpush.msra.mxu0 0.0
    %436 = vmatpush.msra.mxu0 0.0
    %437 = vmatpush.msra.mxu0 0.0
    %438 = vmatpush.msra.mxu0 0.0
    %439 = vmatpush.msra.mxu0 0.0
    %440 = vmatpush.msra.mxu0 0.0
    %441 = vmatpush.msra.mxu0 0.0
    %442 = vmatpush.msra.mxu0 %v419
    %443 = vmatpush.msra.mxu0 %v417
    %444 = vmatmul.f32.gmra.mxu0 %v423
    %v445 = vpop.f32.mrf.mxu0
    %v446 = vadd.f32 0.0, %v445
    %447 = vmatmul.f32.gmra.mxu0 %v426
    %v448 = vpop.f32.mrf.mxu0
    %v449 = vadd.f32 0.0, %v448
    %450 = vdwg.mxu0
    %451 = vrot.lane.b32.xlu0 %v159, 104
    %v452 = vpop.permute.xlu0 %451
    %453 = vrot.lane.b32.xlu0 %v160, 104
    %v454 = vpop.permute.xlu0 %453
    %455 = vrot.lane.b32.xlu0 %v154, 72
    %v456 = vpop.permute.xlu0 %455
    %457 = vrot.lane.b32.xlu0 %v157, 72
    %v458 = vpop.permute.xlu0 %457
    %v459 = vsel %vm167, %v452, 0
    %v461 = vsel %vm167, %v454, 0
    %v463 = vsel %vm167, %v456, 0
    %v465 = vsel %vm167, %v458, 0
    %467 = vmatpush.xpose.msra.mxu0 0.0
    %468 = vmatpush.xpose.msra.mxu0 0.0
    %469 = vmatpush.xpose.msra.mxu0 0.0
    %470 = vmatpush.xpose.msra.mxu0 0.0
    %471 = vmatpush.xpose.msra.mxu0 0.0
    %472 = vmatpush.xpose.msra.mxu0 0.0
    %473 = vmatpush.xpose.msra.mxu0 0.0
    %474 = vmatpush.xpose.msra.mxu0 0.0
    %475 = vmatpush.xpose.msra.mxu0 0.0
    %476 = vmatpush.xpose.msra.mxu0 0.0
    %477 = vmatpush.xpose.msra.mxu0 0.0
    %478 = vmatpush.xpose.msra.mxu0 0.0
    %479 = vmatpush.xpose.msra.mxu0 0.0
    %480 = vmatpush.xpose.msra.mxu0 0.0
    %481 = vmatpush.xpose.msra.mxu0 %v465
    %482 = vmatpush.xpose.msra.mxu0 %v463
    %483 = vmatmul.f32.gmra.mxu0 %v459
    %v484 = vpop.f32.mrf.mxu0
    %v485 = vadd.f32 %v127, %v484
    %486 = vmatmul.f32.gmra.mxu0 %v461
    %v487 = vpop.f32.mrf.mxu0
    %v488 = vadd.f32 %v128, %v487
    %489 = vdwg.mxu0
    %v490 = vsel %vm201, %v485, -inf
    %491 = vmax.xlane.f32.xlu0 %v490
    %v492 = vpop.xlane.xlu0 %491
    %v493 = vsel %vm201, %v488, -inf
    %494 = vmax.xlane.f32.xlu0 %v493
    %v495 = vpop.xlane.xlu0 %494
    %v496 = vsub.f32 %v485, %v492
    %v497 = vsub.f32 %v488, %v495
    %v498 = vmul.f32 %v496, 1.442695
    %v499 = vpow.pop %v498
    %v500 = vmul.f32 %v497, 1.442695
    %v501 = vpow.pop %v500
    %v502 = vsel %vm201, %v499, 0.0
    %503 = vadd.xlane.f32.xlu0 %v502
    %v504 = vpop.xlane.xlu0 %503
    %v505 = vsel %vm201, %v501, 0.0
    %506 = vadd.xlane.f32.xlu0 %v505
    %v507 = vpop.xlane.xlu0 %506
    %v508 = vrcp.pop %v504
    %v509 = vrcp.pop %v507
    %v510 = vmul.f32 %v499, %v508
    %v511 = vmul.f32 %v501, %v509
    %512 = vrot.lane.b32.xlu0 %v154, 40
    %v513 = vpop.permute.xlu0 %512
    %514 = vrot.lane.b32.xlu0 %v157, 40
    %v515 = vpop.permute.xlu0 %514
    %v519 = vsel %vm201, %v510, 0
    %v522 = vsel %vm201, %v511, 0
    %524 = vmatpush.msra.mxu0 0.0
    %525 = vmatpush.msra.mxu0 0.0
    %526 = vmatpush.msra.mxu0 0.0
    %527 = vmatpush.msra.mxu0 0.0
    %528 = vmatpush.msra.mxu0 0.0
    %529 = vmatpush.msra.mxu0 0.0
    %530 = vmatpush.msra.mxu0 0.0
    %531 = vmatpush.msra.mxu0 0.0
    %532 = vmatpush.msra.mxu0 0.0
    %533 = vmatpush.msra.mxu0 0.0
    %534 = vmatpush.msra.mxu0 0.0
    %535 = vmatpush.msra.mxu0 0.0
    %536 = vmatpush.msra.mxu0 0.0
    %537 = vmatpush.msra.mxu0 0.0
    %538 = vmatpush.msra.mxu0 %v515
    %539 = vmatpush.msra.mxu0 %v513
    %540 = vmatmul.f32.gmra.mxu0 %v519
    %v541 = vpop.f32.mrf.mxu0
    %v542 = vadd.f32 0.0, %v541
    %543 = vmatmul.f32.gmra.mxu0 %v522
    %v544 = vpop.f32.mrf.mxu0
    %v545 = vadd.f32 0.0, %v544
    %546 = vdwg.mxu0
    %549 = vrot.lane.b32.xlu0 %v350, 8
    %v550 = vpop.permute.xlu0 %549
    %551 = vrot.lane.b32.xlu0 %v353, 8
    %v552 = vpop.permute.xlu0 %551
    %557 = vrot.lane.b32.xlu0 %v446, 16
    %v558 = vpop.permute.xlu0 %557
    %559 = vrot.lane.b32.xlu0 %v449, 16
    %v560 = vpop.permute.xlu0 %559
    %565 = vrot.lane.b32.xlu0 %v542, 24
    %v566 = vpop.permute.xlu0 %565
    %567 = vrot.lane.b32.xlu0 %v545, 24
    %v568 = vpop.permute.xlu0 %567
    %v571 = vsel %vm167, %v254, %v550
    %v572 = vsel %vm167, %v257, %v552
    %v573 = vsel %vm201, %v571, %v558
    %v574 = vsel %vm201, %v572, %v560
    %vm575 = vcmask 195584
    %v576 = vsel %vm575, %v573, %v566
    %v577 = vsel %vm575, %v574, %v568
    %v579 = vsel %vm129, %v576, 0
    %v582 = vsel %vm129, %v577, 0
    %584 = vmatpush.msra.mxu0 0.0
    %585 = vmatpush.msra.mxu0 0.0
    %586 = vmatpush.msra.mxu0 0.0
    %587 = vmatpush.msra.mxu0 0.0
    %588 = vmatpush.msra.mxu0 0.0
    %589 = vmatpush.msra.mxu0 0.0
    %590 = vmatpush.msra.mxu0 0.0
    %591 = vmatpush.msra.mxu0 0.0
    %592 = vmatpush.msra.mxu0 0.0
    %593 = vmatpush.msra.mxu0 0.0
    %594 = vmatpush.msra.mxu0 0.0
    %595 = vmatpush.msra.mxu0 0.0
    %596 = vmatpush.msra.mxu0 %v62
    %597 = vmatpush.msra.mxu0 %v59
    %598 = vmatpush.msra.mxu0 %v56
    %599 = vmatpush.msra.mxu0 %v53
    %600 = vmatmul.f32.gmra.mxu0 %v579
    %v601 = vpop.f32.mrf.mxu0
    %v602 = vadd.f32 %v75, %v601
    %603 = vmatmul.f32.gmra.mxu0 %v582
    %v604 = vpop.f32.mrf.mxu0
    %v605 = vadd.f32 %v75, %v604
    %606 = vdwg.mxu0
    %v607 = vadd.f32 %v50, %v602
    %v608 = vadd.f32 %v51, %v605
    %v609 = vsel %vm129, %v607, 0.0
    %610 = vadd.xlane.f32.xlu0 %v609
    %v611 = vpop.xlane.xlu0 %610
    %v612 = vsel %vm129, %v608, 0.0
    %613 = vadd.xlane.f32.xlu0 %v612
    %v614 = vpop.xlane.xlu0 %613
    %v615 = vrcp.pop 32.0
    %v616 = vmul.f32 32.0, %v615
    %v617 = vsub.f32 1.0, %v616
    %v618 = vmul.f32 %v615, %v617
    %v619 = vadd.f32 %v615, %v618
    %vm620 = vweird.f32 %v615
    %v621 = vsel %vm620, %v615, %v619
    %v622 = vmul.f32 %v611, %v621
    %v623 = vmul.f32 %v614, %v621
    %v624 = vsub.f32 %v607, %v622
    %v625 = vsub.f32 %v608, %v623
    %v626 = vmul.f32 %v624, %v624
    %v627 = vmul.f32 %v625, %v625
    %v628 = vsel %vm129, %v626, 0.0
    %629 = vadd.xlane.f32.xlu0 %v628
    %v630 = vpop.xlane.xlu0 %629
    %v631 = vsel %vm129, %v627, 0.0
    %632 = vadd.xlane.f32.xlu0 %v631
    %v633 = vpop.xlane.xlu0 %632
    %v634 = vmul.f32 %v630, %v621
    %v635 = vmul.f32 %v633, %v621
    %v636 = vadd.f32 %v634, 1e-05
    %v637 = vadd.f32 %v635, 1e-05
    %v638 = vrsqrt.pop %v636
    %v639 = vmul.f32 %v638, %v636
    %v640 = vmul.f32 %v639, %v638
    %v641 = vmul.f32 0.5, %v640
    %v642 = vsub.f32 1.5, %v641
    %v643 = vmul.f32 %v638, %v642
    %vm644 = vweird.f32 %v636
    %vm645 = vweird.f32 %v638
    %vm646 = vmor %vm644, %vm645
    %v647 = vsel %vm646, %v638, %v643
    %v648 = vrsqrt.pop %v637
    %v649 = vmul.f32 %v648, %v637
    %v650 = vmul.f32 %v649, %v648
    %v651 = vmul.f32 0.5, %v650
    %v652 = vsub.f32 1.5, %v651
    %v653 = vmul.f32 %v648, %v652
    %vm654 = vweird.f32 %v637
    %vm655 = vweird.f32 %v648
    %vm656 = vmor %vm654, %vm655
    %v657 = vsel %vm656, %v648, %v653
    %v658 = vmul.f32 %v624, %v647
    %v659 = vmul.f32 %v625, %v657
    %v660 = vmul.f32 %v658, %v78
    %v661 = vmul.f32 %v659, %v78
    %v662 = vadd.f32 %v660, %v79
    %v663 = vadd.f32 %v661, %v79
    %v665 = vsel %vm129, %v662, 0
    %v668 = vsel %vm129, %v663, 0
    %670 = vmatpush.msra.mxu0 0.0
    %671 = vmatpush.msra.mxu0 0.0
    %672 = vmatpush.msra.mxu0 0.0
    %673 = vmatpush.msra.mxu0 0.0
    %674 = vmatpush.msra.mxu0 0.0
    %675 = vmatpush.msra.mxu0 0.0
    %676 = vmatpush.msra.mxu0 0.0
    %677 = vmatpush.msra.mxu0 0.0
    %678 = vmatpush.msra.mxu0 0.0
    %679 = vmatpush.msra.mxu0 0.0
    %680 = vmatpush.msra.mxu0 0.0
    %681 = vmatpush.msra.mxu0 0.0
    %682 = vmatpush.msra.mxu0 %v63
    %683 = vmatpush.msra.mxu0 %v60
    %684 = vmatpush.msra.mxu0 %v57
    %685 = vmatpush.msra.mxu0 %v54
    %686 = vmatmul.f32.gmra.mxu0 %v665
    %v687 = vpop.f32.mrf.mxu0
    %v688 = vadd.f32 %v76, %v687
    %689 = vmatmul.f32.gmra.mxu0 %v668
    %v690 = vpop.f32.mrf.mxu0
    %v691 = vadd.f32 %v76, %v690
    %692 = vdwg.mxu0
    %v693 = vmax.f32 %v688, 0.0
    %v694 = vmax.f32 %v691, 0.0
    %vm695 = vcmask 523264
    %v697 = vsel %vm695, %v693, 0
    %v700 = vsel %vm695, %v694, 0
    %702 = vmatpush.msra.mxu0 0.0
    %703 = vmatpush.msra.mxu0 0.0
    %704 = vmatpush.msra.mxu0 0.0
    %705 = vmatpush.msra.mxu0 0.0
    %706 = vmatpush.msra.mxu0 0.0
    %707 = vmatpush.msra.mxu0 0.0
    %708 = vmatpush.msra.mxu0 0.0
    %709 = vmatpush.msra.mxu0 0.0
    %710 = vmatpush.msra.mxu0 %v71
    %711 = vmatpush.msra.mxu0 %v70
    %712 = vmatpush.msra.mxu0 %v69
    %713 = vmatpush.msra.mxu0 %v68
    %714 = vmatpush.msra.mxu0 %v67
    %715 = vmatpush.msra.mxu0 %v66
    %716 = vmatpush.msra.mxu0 %v65
    %717 = vmatpush.msra.mxu0 %v64
    %718 = vmatmul.f32.gmra.mxu0 %v697
    %v719 = vpop.f32.mrf.mxu0
    %v720 = vadd.f32 %v77, %v719
    %721 = vmatmul.f32.gmra.mxu0 %v700
    %v722 = vpop.f32.mrf.mxu0
    %v723 = vadd.f32 %v77, %v722
    %724 = vdwg.mxu0
    %v725 = vadd.f32 %v662, %v720
    %v726 = vadd.f32 %v663, %v723
    %v727 = vsel %vm129, %v725, 0.0
    %728 = vadd.xlane.f32.xlu0 %v727
    %v729 = vpop.xlane.xlu0 %728
    %v730 = vsel %vm129, %v726, 0.0
    %731 = vadd.xlane.f32.xlu0 %v730
    %v732 = vpop.xlane.xlu0 %731
    %v733 = vmul.f32 %v729, %v621
    %v734 = vmul.f32 %v732, %v621
    %v735 = vsub.f32 %v725, %v733
    %v736 = vsub.f32 %v726, %v734
    %v737 = vmul.f32 %v735, %v735
    %v738 = vmul.f32 %v736, %v736
    %v739 = vsel %vm129, %v737, 0.0
    %740 = vadd.xlane.f32.xlu0 %v739
    %v741 = vpop.xlane.xlu0 %740
    %v742 = vsel %vm129, %v738, 0.0
    %743 = vadd.xlane.f32.xlu0 %v742
    %v744 = vpop.xlane.xlu0 %743
    %v745 = vmul.f32 %v741, %v621
    %v746 = vmul.f32 %v744, %v621
    %v747 = vadd.f32 %v745, 1e-05
    %v748 = vadd.f32 %v746, 1e-05
    %v749 = vrsqrt.pop %v747
    %v750 = vmul.f32 %v749, %v747
    %v751 = vmul.f32 %v750, %v749
    %v752 = vmul.f32 0.5, %v751
    %v753 = vsub.f32 1.5, %v752
    %v754 = vmul.f32 %v749, %v753
    %vm755 = vweird.f32 %v747
    %vm756 = vweird.f32 %v749
    %vm757 = vmor %vm755, %vm756
    %v758 = vsel %vm757, %v749, %v754
    %v759 = vrsqrt.pop %v748
    %v760 = vmul.f32 %v759, %v748
    %v761 = vmul.f32 %v760, %v759
    %v762 = vmul.f32 0.5, %v761
    %v763 = vsub.f32 1.5, %v762
    %v764 = vmul.f32 %v759, %v763
    %vm765 = vweird.f32 %v748
    %vm766 = vweird.f32 %v759
    %vm767 = vmor %vm765, %vm766
    %v768 = vsel %vm767, %v759, %v764
    %v769 = vmul.f32 %v735, %v758
    %v770 = vmul.f32 %v736, %v768
    %v771 = vmul.f32 %v769, %v80
    %v772 = vmul.f32 %v770, %v80
    %v773 = vadd.f32 %v771, %v81
    %v774 = vadd.f32 %v772, %v81
    %v776 = vsel %vm129, %v773, 0
    %v779 = vsel %vm129, %v774, 0
    %781 = vmatpush.msra.mxu0 0.0
    %782 = vmatpush.msra.mxu0 0.0
    %783 = vmatpush.msra.mxu0 0.0
    %784 = vmatpush.msra.mxu0 0.0
    %785 = vmatpush.msra.mxu0 0.0
    %786 = vmatpush.msra.mxu0 0.0
    %787 = vmatpush.msra.mxu0 0.0
    %788 = vmatpush.msra.mxu0 0.0
    %789 = vmatpush.msra.mxu0 0.0
    %790 = vmatpush.msra.mxu0 0.0
    %791 = vmatpush.msra.mxu0 0.0
    %792 = vmatpush.msra.mxu0 0.0
    %793 = vmatpush.msra.mxu0 %v61
    %794 = vmatpush.msra.mxu0 %v58
    %795 = vmatpush.msra.mxu0 %v55
    %796 = vmatpush.msra.mxu0 %v52
    %797 = vmatmul.f32.gmra.mxu0 %v776
    %v798 = vpop.f32.mrf.mxu0
    %v799 = vadd.f32 %v74, %v798
    %800 = vmatmul.f32.gmra.mxu0 %v779
    %v801 = vpop.f32.mrf.mxu0
    %v802 = vadd.f32 %v74, %v801
    %803 = vdwg.mxu0
    %v804 = vmul.f32 %v799, 0.35355338
    %v805 = vmul.f32 %v802, 0.35355338
    %808 = vrot.lane.b32.xlu0 %v799, 96
    %v809 = vpop.permute.xlu0 %808
    %810 = vrot.lane.b32.xlu0 %v802, 96
    %v811 = vpop.permute.xlu0 %810
    %v813 = vsel %vm167, %v804, 0
    %v816 = vsel %vm167, %v805, 0
    %v818 = vsel %vm167, %v809, 0
    %v820 = vsel %vm167, %v811, 0
    %822 = vmatpush.xpose.msra.mxu0 0.0
    %823 = vmatpush.xpose.msra.mxu0 0.0
    %824 = vmatpush.xpose.msra.mxu0 0.0
    %825 = vmatpush.xpose.msra.mxu0 0.0
    %826 = vmatpush.xpose.msra.mxu0 0.0
    %827 = vmatpush.xpose.msra.mxu0 0.0
    %828 = vmatpush.xpose.msra.mxu0 0.0
    %829 = vmatpush.xpose.msra.mxu0 0.0
    %830 = vmatpush.xpose.msra.mxu0 0.0
    %831 = vmatpush.xpose.msra.mxu0 0.0
    %832 = vmatpush.xpose.msra.mxu0 0.0
    %833 = vmatpush.xpose.msra.mxu0 0.0
    %834 = vmatpush.xpose.msra.mxu0 0.0
    %835 = vmatpush.xpose.msra.mxu0 0.0
    %836 = vmatpush.xpose.msra.mxu0 %v820
    %837 = vmatpush.xpose.msra.mxu0 %v818
    %838 = vmatmul.f32.gmra.mxu0 %v813
    %v839 = vpop.f32.mrf.mxu0
    %v840 = vadd.f32 %v127, %v839
    %841 = vmatmul.f32.gmra.mxu0 %v816
    %v842 = vpop.f32.mrf.mxu0
    %v843 = vadd.f32 %v128, %v842
    %844 = vdwg.mxu0
    %v845 = vsel %vm201, %v840, -inf
    %846 = vmax.xlane.f32.xlu0 %v845
    %v847 = vpop.xlane.xlu0 %846
    %v848 = vsel %vm201, %v843, -inf
    %849 = vmax.xlane.f32.xlu0 %v848
    %v850 = vpop.xlane.xlu0 %849
    %v851 = vsub.f32 %v840, %v847
    %v852 = vsub.f32 %v843, %v850
    %v853 = vmul.f32 %v851, 1.442695
    %v854 = vpow.pop %v853
    %v855 = vmul.f32 %v852, 1.442695
    %v856 = vpow.pop %v855
    %v857 = vsel %vm201, %v854, 0.0
    %858 = vadd.xlane.f32.xlu0 %v857
    %v859 = vpop.xlane.xlu0 %858
    %v860 = vsel %vm201, %v856, 0.0
    %861 = vadd.xlane.f32.xlu0 %v860
    %v862 = vpop.xlane.xlu0 %861
    %v863 = vrcp.pop %v859
    %v864 = vrcp.pop %v862
    %v865 = vmul.f32 %v854, %v863
    %v866 = vmul.f32 %v856, %v864
    %867 = vrot.lane.b32.xlu0 %v799, 64
    %v868 = vpop.permute.xlu0 %867
    %869 = vrot.lane.b32.xlu0 %v802, 64
    %v870 = vpop.permute.xlu0 %869
    %v874 = vsel %vm201, %v865, 0
    %v877 = vsel %vm201, %v866, 0
    %879 = vmatpush.msra.mxu0 0.0
    %880 = vmatpush.msra.mxu0 0.0
    %881 = vmatpush.msra.mxu0 0.0
    %882 = vmatpush.msra.mxu0 0.0
    %883 = vmatpush.msra.mxu0 0.0
    %884 = vmatpush.msra.mxu0 0.0
    %885 = vmatpush.msra.mxu0 0.0
    %886 = vmatpush.msra.mxu0 0.0
    %887 = vmatpush.msra.mxu0 0.0
    %888 = vmatpush.msra.mxu0 0.0
    %889 = vmatpush.msra.mxu0 0.0
    %890 = vmatpush.msra.mxu0 0.0
    %891 = vmatpush.msra.mxu0 0.0
    %892 = vmatpush.msra.mxu0 0.0
    %893 = vmatpush.msra.mxu0 %v870
    %894 = vmatpush.msra.mxu0 %v868
    %895 = vmatmul.f32.gmra.mxu0 %v874
    %v896 = vpop.f32.mrf.mxu0
    %v897 = vadd.f32 0.0, %v896
    %898 = vmatmul.f32.gmra.mxu0 %v877
    %v899 = vpop.f32.mrf.mxu0
    %v900 = vadd.f32 0.0, %v899
    %901 = vdwg.mxu0
    %902 = vrot.lane.b32.xlu0 %v804, 120
    %v903 = vpop.permute.xlu0 %902
    %904 = vrot.lane.b32.xlu0 %v805, 120
    %v905 = vpop.permute.xlu0 %904
    %906 = vrot.lane.b32.xlu0 %v799, 88
    %v907 = vpop.permute.xlu0 %906
    %908 = vrot.lane.b32.xlu0 %v802, 88
    %v909 = vpop.permute.xlu0 %908
    %v910 = vsel %vm167, %v903, 0
    %v912 = vsel %vm167, %v905, 0
    %v914 = vsel %vm167, %v907, 0
    %v916 = vsel %vm167, %v909, 0
    %918 = vmatpush.xpose.msra.mxu0 0.0
    %919 = vmatpush.xpose.msra.mxu0 0.0
    %920 = vmatpush.xpose.msra.mxu0 0.0
    %921 = vmatpush.xpose.msra.mxu0 0.0
    %922 = vmatpush.xpose.msra.mxu0 0.0
    %923 = vmatpush.xpose.msra.mxu0 0.0
    %924 = vmatpush.xpose.msra.mxu0 0.0
    %925 = vmatpush.xpose.msra.mxu0 0.0
    %926 = vmatpush.xpose.msra.mxu0 0.0
    %927 = vmatpush.xpose.msra.mxu0 0.0
    %928 = vmatpush.xpose.msra.mxu0 0.0
    %929 = vmatpush.xpose.msra.mxu0 0.0
    %930 = vmatpush.xpose.msra.mxu0 0.0
    %931 = vmatpush.xpose.msra.mxu0 0.0
    %932 = vmatpush.xpose.msra.mxu0 %v916
    %933 = vmatpush.xpose.msra.mxu0 %v914
    %934 = vmatmul.f32.gmra.mxu0 %v910
    %v935 = vpop.f32.mrf.mxu0
    %v936 = vadd.f32 %v127, %v935
    %937 = vmatmul.f32.gmra.mxu0 %v912
    %v938 = vpop.f32.mrf.mxu0
    %v939 = vadd.f32 %v128, %v938
    %940 = vdwg.mxu0
    %v941 = vsel %vm201, %v936, -inf
    %942 = vmax.xlane.f32.xlu0 %v941
    %v943 = vpop.xlane.xlu0 %942
    %v944 = vsel %vm201, %v939, -inf
    %945 = vmax.xlane.f32.xlu0 %v944
    %v946 = vpop.xlane.xlu0 %945
    %v947 = vsub.f32 %v936, %v943
    %v948 = vsub.f32 %v939, %v946
    %v949 = vmul.f32 %v947, 1.442695
    %v950 = vpow.pop %v949
    %v951 = vmul.f32 %v948, 1.442695
    %v952 = vpow.pop %v951
    %v953 = vsel %vm201, %v950, 0.0
    %954 = vadd.xlane.f32.xlu0 %v953
    %v955 = vpop.xlane.xlu0 %954
    %v956 = vsel %vm201, %v952, 0.0
    %957 = vadd.xlane.f32.xlu0 %v956
    %v958 = vpop.xlane.xlu0 %957
    %v959 = vrcp.pop %v955
    %v960 = vrcp.pop %v958
    %v961 = vmul.f32 %v950, %v959
    %v962 = vmul.f32 %v952, %v960
    %963 = vrot.lane.b32.xlu0 %v799, 56
    %v964 = vpop.permute.xlu0 %963
    %965 = vrot.lane.b32.xlu0 %v802, 56
    %v966 = vpop.permute.xlu0 %965
    %v970 = vsel %vm201, %v961, 0
    %v973 = vsel %vm201, %v962, 0
    %975 = vmatpush.msra.mxu0 0.0
    %976 = vmatpush.msra.mxu0 0.0
    %977 = vmatpush.msra.mxu0 0.0
    %978 = vmatpush.msra.mxu0 0.0
    %979 = vmatpush.msra.mxu0 0.0
    %980 = vmatpush.msra.mxu0 0.0
    %981 = vmatpush.msra.mxu0 0.0
    %982 = vmatpush.msra.mxu0 0.0
    %983 = vmatpush.msra.mxu0 0.0
    %984 = vmatpush.msra.mxu0 0.0
    %985 = vmatpush.msra.mxu0 0.0
    %986 = vmatpush.msra.mxu0 0.0
    %987 = vmatpush.msra.mxu0 0.0
    %988 = vmatpush.msra.mxu0 0.0
    %989 = vmatpush.msra.mxu0 %v966
    %990 = vmatpush.msra.mxu0 %v964
    %991 = vmatmul.f32.gmra.mxu0 %v970
    %v992 = vpop.f32.mrf.mxu0
    %v993 = vadd.f32 0.0, %v992
    %994 = vmatmul.f32.gmra.mxu0 %v973
    %v995 = vpop.f32.mrf.mxu0
    %v996 = vadd.f32 0.0, %v995
    %997 = vdwg.mxu0
    %998 = vrot.lane.b32.xlu0 %v804, 112
    %v999 = vpop.permute.xlu0 %998
    %1000 = vrot.lane.b32.xlu0 %v805, 112
    %v1001 = vpop.permute.xlu0 %1000
    %1002 = vrot.lane.b32.xlu0 %v799, 80
    %v1003 = vpop.permute.xlu0 %1002
    %1004 = vrot.lane.b32.xlu0 %v802, 80
    %v1005 = vpop.permute.xlu0 %1004
    %v1006 = vsel %vm167, %v999, 0
    %v1008 = vsel %vm167, %v1001, 0
    %v1010 = vsel %vm167, %v1003, 0
    %v1012 = vsel %vm167, %v1005, 0
    %1014 = vmatpush.xpose.msra.mxu0 0.0
    %1015 = vmatpush.xpose.msra.mxu0 0.0
    %1016 = vmatpush.xpose.msra.mxu0 0.0
    %1017 = vmatpush.xpose.msra.mxu0 0.0
    %1018 = vmatpush.xpose.msra.mxu0 0.0
    %1019 = vmatpush.xpose.msra.mxu0 0.0
    %1020 = vmatpush.xpose.msra.mxu0 0.0
    %1021 = vmatpush.xpose.msra.mxu0 0.0
    %1022 = vmatpush.xpose.msra.mxu0 0.0
    %1023 = vmatpush.xpose.msra.mxu0 0.0
    %1024 = vmatpush.xpose.msra.mxu0 0.0
    %1025 = vmatpush.xpose.msra.mxu0 0.0
    %1026 = vmatpush.xpose.msra.mxu0 0.0
    %1027 = vmatpush.xpose.msra.mxu0 0.0
    %1028 = vmatpush.xpose.msra.mxu0 %v1012
    %1029 = vmatpush.xpose.msra.mxu0 %v1010
    %1030 = vmatmul.f32.gmra.mxu0 %v1006
    %v1031 = vpop.f32.mrf.mxu0
    %v1032 = vadd.f32 %v127, %v1031
    %1033 = vmatmul.f32.gmra.mxu0 %v1008
    %v1034 = vpop.f32.mrf.mxu0
    %v1035 = vadd.f32 %v128, %v1034
    %1036 = vdwg.mxu0
    %v1037 = vsel %vm201, %v1032, -inf
    %1038 = vmax.xlane.f32.xlu0 %v1037
    %v1039 = vpop.xlane.xlu0 %1038
    %v1040 = vsel %vm201, %v1035, -inf
    %1041 = vmax.xlane.f32.xlu0 %v1040
    %v1042 = vpop.xlane.xlu0 %1041
    %v1043 = vsub.f32 %v1032, %v1039
    %v1044 = vsub.f32 %v1035, %v1042
    %v1045 = vmul.f32 %v1043, 1.442695
    %v1046 = vpow.pop %v1045
    %v1047 = vmul.f32 %v1044, 1.442695
    %v1048 = vpow.pop %v1047
    %v1049 = vsel %vm201, %v1046, 0.0
    %1050 = vadd.xlane.f32.xlu0 %v1049
    %v1051 = vpop.xlane.xlu0 %1050
    %v1052 = vsel %vm201, %v1048, 0.0
    %1053 = vadd.xlane.f32.xlu0 %v1052
    %v1054 = vpop.xlane.xlu0 %1053
    %v1055 = vrcp.pop %v1051
    %v1056 = vrcp.pop %v1054
    %v1057 = vmul.f32 %v1046, %v1055
    %v1058 = vmul.f32 %v1048, %v1056
    %1059 = vrot.lane.b32.xlu0 %v799, 48
    %v1060 = vpop.permute.xlu0 %1059
    %1061 = vrot.lane.b32.xlu0 %v802, 48
    %v1062 = vpop.permute.xlu0 %1061
    %v1066 = vsel %vm201, %v1057, 0
    %v1069 = vsel %vm201, %v1058, 0
    %1071 = vmatpush.msra.mxu0 0.0
    %1072 = vmatpush.msra.mxu0 0.0
    %1073 = vmatpush.msra.mxu0 0.0
    %1074 = vmatpush.msra.mxu0 0.0
    %1075 = vmatpush.msra.mxu0 0.0
    %1076 = vmatpush.msra.mxu0 0.0
    %1077 = vmatpush.msra.mxu0 0.0
    %1078 = vmatpush.msra.mxu0 0.0
    %1079 = vmatpush.msra.mxu0 0.0
    %1080 = vmatpush.msra.mxu0 0.0
    %1081 = vmatpush.msra.mxu0 0.0
    %1082 = vmatpush.msra.mxu0 0.0
    %1083 = vmatpush.msra.mxu0 0.0
    %1084 = vmatpush.msra.mxu0 0.0
    %1085 = vmatpush.msra.mxu0 %v1062
    %1086 = vmatpush.msra.mxu0 %v1060
    %1087 = vmatmul.f32.gmra.mxu0 %v1066
    %v1088 = vpop.f32.mrf.mxu0
    %v1089 = vadd.f32 0.0, %v1088
    %1090 = vmatmul.f32.gmra.mxu0 %v1069
    %v1091 = vpop.f32.mrf.mxu0
    %v1092 = vadd.f32 0.0, %v1091
    %1093 = vdwg.mxu0
    %1094 = vrot.lane.b32.xlu0 %v804, 104
    %v1095 = vpop.permute.xlu0 %1094
    %1096 = vrot.lane.b32.xlu0 %v805, 104
    %v1097 = vpop.permute.xlu0 %1096
    %1098 = vrot.lane.b32.xlu0 %v799, 72
    %v1099 = vpop.permute.xlu0 %1098
    %1100 = vrot.lane.b32.xlu0 %v802, 72
    %v1101 = vpop.permute.xlu0 %1100
    %v1102 = vsel %vm167, %v1095, 0
    %v1104 = vsel %vm167, %v1097, 0
    %v1106 = vsel %vm167, %v1099, 0
    %v1108 = vsel %vm167, %v1101, 0
    %1110 = vmatpush.xpose.msra.mxu0 0.0
    %1111 = vmatpush.xpose.msra.mxu0 0.0
    %1112 = vmatpush.xpose.msra.mxu0 0.0
    %1113 = vmatpush.xpose.msra.mxu0 0.0
    %1114 = vmatpush.xpose.msra.mxu0 0.0
    %1115 = vmatpush.xpose.msra.mxu0 0.0
    %1116 = vmatpush.xpose.msra.mxu0 0.0
    %1117 = vmatpush.xpose.msra.mxu0 0.0
    %1118 = vmatpush.xpose.msra.mxu0 0.0
    %1119 = vmatpush.xpose.msra.mxu0 0.0
    %1120 = vmatpush.xpose.msra.mxu0 0.0
    %1121 = vmatpush.xpose.msra.mxu0 0.0
    %1122 = vmatpush.xpose.msra.mxu0 0.0
    %1123 = vmatpush.xpose.msra.mxu0 0.0
    %1124 = vmatpush.xpose.msra.mxu0 %v1108
    %1125 = vmatpush.xpose.msra.mxu0 %v1106
    %1126 = vmatmul.f32.gmra.mxu0 %v1102
    %v1127 = vpop.f32.mrf.mxu0
    %v1128 = vadd.f32 %v127, %v1127
    %1129 = vmatmul.f32.gmra.mxu0 %v1104
    %v1130 = vpop.f32.mrf.mxu0
    %v1131 = vadd.f32 %v128, %v1130
    %1132 = vdwg.mxu0
    %v1133 = vsel %vm201, %v1128, -inf
    %1134 = vmax.xlane.f32.xlu0 %v1133
    %v1135 = vpop.xlane.xlu0 %1134
    %v1136 = vsel %vm201, %v1131, -inf
    %1137 = vmax.xlane.f32.xlu0 %v1136
    %v1138 = vpop.xlane.xlu0 %1137
    %v1139 = vsub.f32 %v1128, %v1135
    %v1140 = vsub.f32 %v1131, %v1138
    %v1141 = vmul.f32 %v1139, 1.442695
    %v1142 = vpow.pop %v1141
    %v1143 = vmul.f32 %v1140, 1.442695
    %v1144 = vpow.pop %v1143
    %v1145 = vsel %vm201, %v1142, 0.0
    %1146 = vadd.xlane.f32.xlu0 %v1145
    %v1147 = vpop.xlane.xlu0 %1146
    %v1148 = vsel %vm201, %v1144, 0.0
    %1149 = vadd.xlane.f32.xlu0 %v1148
    %v1150 = vpop.xlane.xlu0 %1149
    %v1151 = vrcp.pop %v1147
    %v1152 = vrcp.pop %v1150
    %v1153 = vmul.f32 %v1142, %v1151
    %v1154 = vmul.f32 %v1144, %v1152
    %1155 = vrot.lane.b32.xlu0 %v799, 40
    %v1156 = vpop.permute.xlu0 %1155
    %1157 = vrot.lane.b32.xlu0 %v802, 40
    %v1158 = vpop.permute.xlu0 %1157
    %v1162 = vsel %vm201, %v1153, 0
    %v1165 = vsel %vm201, %v1154, 0
    %1167 = vmatpush.msra.mxu0 0.0
    %1168 = vmatpush.msra.mxu0 0.0
    %1169 = vmatpush.msra.mxu0 0.0
    %1170 = vmatpush.msra.mxu0 0.0
    %1171 = vmatpush.msra.mxu0 0.0
    %1172 = vmatpush.msra.mxu0 0.0
    %1173 = vmatpush.msra.mxu0 0.0
    %1174 = vmatpush.msra.mxu0 0.0
    %1175 = vmatpush.msra.mxu0 0.0
    %1176 = vmatpush.msra.mxu0 0.0
    %1177 = vmatpush.msra.mxu0 0.0
    %1178 = vmatpush.msra.mxu0 0.0
    %1179 = vmatpush.msra.mxu0 0.0
    %1180 = vmatpush.msra.mxu0 0.0
    %1181 = vmatpush.msra.mxu0 %v1158
    %1182 = vmatpush.msra.mxu0 %v1156
    %1183 = vmatmul.f32.gmra.mxu0 %v1162
    %v1184 = vpop.f32.mrf.mxu0
    %v1185 = vadd.f32 0.0, %v1184
    %1186 = vmatmul.f32.gmra.mxu0 %v1165
    %v1187 = vpop.f32.mrf.mxu0
    %v1188 = vadd.f32 0.0, %v1187
    %1189 = vdwg.mxu0
    %1192 = vrot.lane.b32.xlu0 %v993, 8
    %v1193 = vpop.permute.xlu0 %1192
    %1194 = vrot.lane.b32.xlu0 %v996, 8
    %v1195 = vpop.permute.xlu0 %1194
    %1200 = vrot.lane.b32.xlu0 %v1089, 16
    %v1201 = vpop.permute.xlu0 %1200
    %1202 = vrot.lane.b32.xlu0 %v1092, 16
    %v1203 = vpop.permute.xlu0 %1202
    %1208 = vrot.lane.b32.xlu0 %v1185, 24
    %v1209 = vpop.permute.xlu0 %1208
    %1210 = vrot.lane.b32.xlu0 %v1188, 24
    %v1211 = vpop.permute.xlu0 %1210
    %v1214 = vsel %vm167, %v897, %v1193
    %v1215 = vsel %vm167, %v900, %v1195
    %v1216 = vsel %vm201, %v1214, %v1201
    %v1217 = vsel %vm201, %v1215, %v1203
    %v1218 = vsel %vm575, %v1216, %v1209
    %v1219 = vsel %vm575, %v1217, %v1211
    %v1221 = vsel %vm129, %v1218, 0
    %v1224 = vsel %vm129, %v1219, 0
    %1226 = vmatpush.msra.mxu0 0.0
    %1227 = vmatpush.msra.mxu0 0.0
    %1228 = vmatpush.msra.mxu0 0.0
    %1229 = vmatpush.msra.mxu0 0.0
    %1230 = vmatpush.msra.mxu0 0.0
    %1231 = vmatpush.msra.mxu0 0.0
    %1232 = vmatpush.msra.mxu0 0.0
    %1233 = vmatpush.msra.mxu0 0.0
    %1234 = vmatpush.msra.mxu0 0.0
    %1235 = vmatpush.msra.mxu0 0.0
    %1236 = vmatpush.msra.mxu0 0.0
    %1237 = vmatpush.msra.mxu0 0.0
    %1238 = vmatpush.msra.mxu0 %v62
    %1239 = vmatpush.msra.mxu0 %v59
    %1240 = vmatpush.msra.mxu0 %v56
    %1241 = vmatpush.msra.mxu0 %v53
    %1242 = vmatmul.f32.gmra.mxu0 %v1221
    %v1243 = vpop.f32.mrf.mxu0
    %v1244 = vadd.f32 %v75, %v1243
    %1245 = vmatmul.f32.gmra.mxu0 %v1224
    %v1246 = vpop.f32.mrf.mxu0
    %v1247 = vadd.f32 %v75, %v1246
    %1248 = vdwg.mxu0
    %v1249 = vadd.f32 %v773, %v1244
    %v1250 = vadd.f32 %v774, %v1247
    %v1251 = vsel %vm129, %v1249, 0.0
    %1252 = vadd.xlane.f32.xlu0 %v1251
    %v1253 = vpop.xlane.xlu0 %1252
    %v1254 = vsel %vm129, %v1250, 0.0
    %1255 = vadd.xlane.f32.xlu0 %v1254
    %v1256 = vpop.xlane.xlu0 %1255
    %v1257 = vmul.f32 %v1253, %v621
    %v1258 = vmul.f32 %v1256, %v621
    %v1259 = vsub.f32 %v1249, %v1257
    %v1260 = vsub.f32 %v1250, %v1258
    %v1261 = vmul.f32 %v1259, %v1259
    %v1262 = vmul.f32 %v1260, %v1260
    %v1263 = vsel %vm129, %v1261, 0.0
    %1264 = vadd.xlane.f32.xlu0 %v1263
    %v1265 = vpop.xlane.xlu0 %1264
    %v1266 = vsel %vm129, %v1262, 0.0
    %1267 = vadd.xlane.f32.xlu0 %v1266
    %v1268 = vpop.xlane.xlu0 %1267
    %v1269 = vmul.f32 %v1265, %v621
    %v1270 = vmul.f32 %v1268, %v621
    %v1271 = vadd.f32 %v1269, 1e-05
    %v1272 = vadd.f32 %v1270, 1e-05
    %v1273 = vrsqrt.pop %v1271
    %v1274 = vmul.f32 %v1273, %v1271
    %v1275 = vmul.f32 %v1274, %v1273
    %v1276 = vmul.f32 0.5, %v1275
    %v1277 = vsub.f32 1.5, %v1276
    %v1278 = vmul.f32 %v1273, %v1277
    %vm1279 = vweird.f32 %v1271
    %vm1280 = vweird.f32 %v1273
    %vm1281 = vmor %vm1279, %vm1280
    %v1282 = vsel %vm1281, %v1273, %v1278
    %v1283 = vrsqrt.pop %v1272
    %v1284 = vmul.f32 %v1283, %v1272
    %v1285 = vmul.f32 %v1284, %v1283
    %v1286 = vmul.f32 0.5, %v1285
    %v1287 = vsub.f32 1.5, %v1286
    %v1288 = vmul.f32 %v1283, %v1287
    %vm1289 = vweird.f32 %v1272
    %vm1290 = vweird.f32 %v1283
    %vm1291 = vmor %vm1289, %vm1290
    %v1292 = vsel %vm1291, %v1283, %v1288
    %v1293 = vmul.f32 %v1259, %v1282
    %v1294 = vmul.f32 %v1260, %v1292
    %v1295 = vmul.f32 %v1293, %v78
    %v1296 = vmul.f32 %v1294, %v78
    %v1297 = vadd.f32 %v1295, %v79
    %v1298 = vadd.f32 %v1296, %v79
    %v1300 = vsel %vm129, %v1297, 0
    %v1303 = vsel %vm129, %v1298, 0
    %1305 = vmatpush.msra.mxu0 0.0
    %1306 = vmatpush.msra.mxu0 0.0
    %1307 = vmatpush.msra.mxu0 0.0
    %1308 = vmatpush.msra.mxu0 0.0
    %1309 = vmatpush.msra.mxu0 0.0
    %1310 = vmatpush.msra.mxu0 0.0
    %1311 = vmatpush.msra.mxu0 0.0
    %1312 = vmatpush.msra.mxu0 0.0
    %1313 = vmatpush.msra.mxu0 0.0
    %1314 = vmatpush.msra.mxu0 0.0
    %1315 = vmatpush.msra.mxu0 0.0
    %1316 = vmatpush.msra.mxu0 0.0
    %1317 = vmatpush.msra.mxu0 %v63
    %1318 = vmatpush.msra.mxu0 %v60
    %1319 = vmatpush.msra.mxu0 %v57
    %1320 = vmatpush.msra.mxu0 %v54
    %1321 = vmatmul.f32.gmra.mxu0 %v1300
    %v1322 = vpop.f32.mrf.mxu0
    %v1323 = vadd.f32 %v76, %v1322
    %1324 = vmatmul.f32.gmra.mxu0 %v1303
    %v1325 = vpop.f32.mrf.mxu0
    %v1326 = vadd.f32 %v76, %v1325
    %1327 = vdwg.mxu0
    %v1328 = vmax.f32 %v1323, 0.0
    %v1329 = vmax.f32 %v1326, 0.0
    %v1331 = vsel %vm695, %v1328, 0
    %v1334 = vsel %vm695, %v1329, 0
    %1336 = vmatpush.msra.mxu0 0.0
    %1337 = vmatpush.msra.mxu0 0.0
    %1338 = vmatpush.msra.mxu0 0.0
    %1339 = vmatpush.msra.mxu0 0.0
    %1340 = vmatpush.msra.mxu0 0.0
    %1341 = vmatpush.msra.mxu0 0.0
    %1342 = vmatpush.msra.mxu0 0.0
    %1343 = vmatpush.msra.mxu0 0.0
    %1344 = vmatpush.msra.mxu0 %v71
    %1345 = vmatpush.msra.mxu0 %v70
    %1346 = vmatpush.msra.mxu0 %v69
    %1347 = vmatpush.msra.mxu0 %v68
    %1348 = vmatpush.msra.mxu0 %v67
    %1349 = vmatpush.msra.mxu0 %v66
    %1350 = vmatpush.msra.mxu0 %v65
    %1351 = vmatpush.msra.mxu0 %v64
    %1352 = vmatmul.f32.gmra.mxu0 %v1331
    %v1353 = vpop.f32.mrf.mxu0
    %v1354 = vadd.f32 %v77, %v1353
    %1355 = vmatmul.f32.gmra.mxu0 %v1334
    %v1356 = vpop.f32.mrf.mxu0
    %v1357 = vadd.f32 %v77, %v1356
    %1358 = vdwg.mxu0
    %v1359 = vadd.f32 %v1297, %v1354
    %v1360 = vadd.f32 %v1298, %v1357
    %v1361 = vsel %vm129, %v1359, 0.0
    %1362 = vadd.xlane.f32.xlu0 %v1361
    %v1363 = vpop.xlane.xlu0 %1362
    %v1364 = vsel %vm129, %v1360, 0.0
    %1365 = vadd.xlane.f32.xlu0 %v1364
    %v1366 = vpop.xlane.xlu0 %1365
    %v1367 = vmul.f32 %v1363, %v621
    %v1368 = vmul.f32 %v1366, %v621
    %v1369 = vsub.f32 %v1359, %v1367
    %v1370 = vsub.f32 %v1360, %v1368
    %v1371 = vmul.f32 %v1369, %v1369
    %v1372 = vmul.f32 %v1370, %v1370
    %v1373 = vsel %vm129, %v1371, 0.0
    %1374 = vadd.xlane.f32.xlu0 %v1373
    %v1375 = vpop.xlane.xlu0 %1374
    %v1376 = vsel %vm129, %v1372, 0.0
    %1377 = vadd.xlane.f32.xlu0 %v1376
    %v1378 = vpop.xlane.xlu0 %1377
    %v1379 = vmul.f32 %v1375, %v621
    %v1380 = vmul.f32 %v1378, %v621
    %v1381 = vadd.f32 %v1379, 1e-05
    %v1382 = vadd.f32 %v1380, 1e-05
    %v1383 = vrsqrt.pop %v1381
    %v1384 = vmul.f32 %v1383, %v1381
    %v1385 = vmul.f32 %v1384, %v1383
    %v1386 = vmul.f32 0.5, %v1385
    %v1387 = vsub.f32 1.5, %v1386
    %v1388 = vmul.f32 %v1383, %v1387
    %vm1389 = vweird.f32 %v1381
    %vm1390 = vweird.f32 %v1383
    %vm1391 = vmor %vm1389, %vm1390
    %v1392 = vsel %vm1391, %v1383, %v1388
    %v1393 = vrsqrt.pop %v1382
    %v1394 = vmul.f32 %v1393, %v1382
    %v1395 = vmul.f32 %v1394, %v1393
    %v1396 = vmul.f32 0.5, %v1395
    %v1397 = vsub.f32 1.5, %v1396
    %v1398 = vmul.f32 %v1393, %v1397
    %vm1399 = vweird.f32 %v1382
    %vm1400 = vweird.f32 %v1393
    %vm1401 = vmor %vm1399, %vm1400
    %v1402 = vsel %vm1401, %v1393, %v1398
    %v1403 = vmul.f32 %v1369, %v1392
    %v1404 = vmul.f32 %v1370, %v1402
    %v1405 = vmul.f32 %v1403, %v80
    %v1406 = vmul.f32 %v1404, %v80
    %v1407 = vadd.f32 %v1405, %v81
    %v1408 = vadd.f32 %v1406, %v81
    %v1410 = vsel %vm129, %v1407, 0
    %v1413 = vsel %vm129, %v1408, 0
    %1415 = vmatpush.msra.mxu0 0.0
    %1416 = vmatpush.msra.mxu0 0.0
    %1417 = vmatpush.msra.mxu0 0.0
    %1418 = vmatpush.msra.mxu0 0.0
    %1419 = vmatpush.msra.mxu0 0.0
    %1420 = vmatpush.msra.mxu0 0.0
    %1421 = vmatpush.msra.mxu0 0.0
    %1422 = vmatpush.msra.mxu0 0.0
    %1423 = vmatpush.msra.mxu0 0.0
    %1424 = vmatpush.msra.mxu0 0.0
    %1425 = vmatpush.msra.mxu0 0.0
    %1426 = vmatpush.msra.mxu0 0.0
    %1427 = vmatpush.msra.mxu0 %v61
    %1428 = vmatpush.msra.mxu0 %v58
    %1429 = vmatpush.msra.mxu0 %v55
    %1430 = vmatpush.msra.mxu0 %v52
    %1431 = vmatmul.f32.gmra.mxu0 %v1410
    %v1432 = vpop.f32.mrf.mxu0
    %v1433 = vadd.f32 %v74, %v1432
    %1434 = vmatmul.f32.gmra.mxu0 %v1413
    %v1435 = vpop.f32.mrf.mxu0
    %v1436 = vadd.f32 %v74, %v1435
    %1437 = vdwg.mxu0
    %v1438 = vmul.f32 %v1433, 0.35355338
    %v1439 = vmul.f32 %v1436, 0.35355338
    %1442 = vrot.lane.b32.xlu0 %v1433, 96
    %v1443 = vpop.permute.xlu0 %1442
    %1444 = vrot.lane.b32.xlu0 %v1436, 96
    %v1445 = vpop.permute.xlu0 %1444
    %v1447 = vsel %vm167, %v1438, 0
    %v1450 = vsel %vm167, %v1439, 0
    %v1452 = vsel %vm167, %v1443, 0
    %v1454 = vsel %vm167, %v1445, 0
    %1456 = vmatpush.xpose.msra.mxu0 0.0
    %1457 = vmatpush.xpose.msra.mxu0 0.0
    %1458 = vmatpush.xpose.msra.mxu0 0.0
    %1459 = vmatpush.xpose.msra.mxu0 0.0
    %1460 = vmatpush.xpose.msra.mxu0 0.0
    %1461 = vmatpush.xpose.msra.mxu0 0.0
    %1462 = vmatpush.xpose.msra.mxu0 0.0
    %1463 = vmatpush.xpose.msra.mxu0 0.0
    %1464 = vmatpush.xpose.msra.mxu0 0.0
    %1465 = vmatpush.xpose.msra.mxu0 0.0
    %1466 = vmatpush.xpose.msra.mxu0 0.0
    %1467 = vmatpush.xpose.msra.mxu0 0.0
    %1468 = vmatpush.xpose.msra.mxu0 0.0
    %1469 = vmatpush.xpose.msra.mxu0 0.0
    %1470 = vmatpush.xpose.msra.mxu0 %v1454
    %1471 = vmatpush.xpose.msra.mxu0 %v1452
    %1472 = vmatmul.f32.gmra.mxu0 %v1447
    %v1473 = vpop.f32.mrf.mxu0
    %v1474 = vadd.f32 %v127, %v1473
    %1475 = vmatmul.f32.gmra.mxu0 %v1450
    %v1476 = vpop.f32.mrf.mxu0
    %v1477 = vadd.f32 %v128, %v1476
    %1478 = vdwg.mxu0
    %v1479 = vsel %vm201, %v1474, -inf
    %1480 = vmax.xlane.f32.xlu0 %v1479
    %v1481 = vpop.xlane.xlu0 %1480
    %v1482 = vsel %vm201, %v1477, -inf
    %1483 = vmax.xlane.f32.xlu0 %v1482
    %v1484 = vpop.xlane.xlu0 %1483
    %v1485 = vsub.f32 %v1474, %v1481
    %v1486 = vsub.f32 %v1477, %v1484
    %v1487 = vmul.f32 %v1485, 1.442695
    %v1488 = vpow.pop %v1487
    %v1489 = vmul.f32 %v1486, 1.442695
    %v1490 = vpow.pop %v1489
    %v1491 = vsel %vm201, %v1488, 0.0
    %1492 = vadd.xlane.f32.xlu0 %v1491
    %v1493 = vpop.xlane.xlu0 %1492
    %v1494 = vsel %vm201, %v1490, 0.0
    %1495 = vadd.xlane.f32.xlu0 %v1494
    %v1496 = vpop.xlane.xlu0 %1495
    %v1497 = vrcp.pop %v1493
    %v1498 = vrcp.pop %v1496
    %v1499 = vmul.f32 %v1488, %v1497
    %v1500 = vmul.f32 %v1490, %v1498
    %1501 = vrot.lane.b32.xlu0 %v1433, 64
    %v1502 = vpop.permute.xlu0 %1501
    %1503 = vrot.lane.b32.xlu0 %v1436, 64
    %v1504 = vpop.permute.xlu0 %1503
    %v1508 = vsel %vm201, %v1499, 0
    %v1511 = vsel %vm201, %v1500, 0
    %1513 = vmatpush.msra.mxu0 0.0
    %1514 = vmatpush.msra.mxu0 0.0
    %1515 = vmatpush.msra.mxu0 0.0
    %1516 = vmatpush.msra.mxu0 0.0
    %1517 = vmatpush.msra.mxu0 0.0
    %1518 = vmatpush.msra.mxu0 0.0
    %1519 = vmatpush.msra.mxu0 0.0
    %1520 = vmatpush.msra.mxu0 0.0
    %1521 = vmatpush.msra.mxu0 0.0
    %1522 = vmatpush.msra.mxu0 0.0
    %1523 = vmatpush.msra.mxu0 0.0
    %1524 = vmatpush.msra.mxu0 0.0
    %1525 = vmatpush.msra.mxu0 0.0
    %1526 = vmatpush.msra.mxu0 0.0
    %1527 = vmatpush.msra.mxu0 %v1504
    %1528 = vmatpush.msra.mxu0 %v1502
    %1529 = vmatmul.f32.gmra.mxu0 %v1508
    %v1530 = vpop.f32.mrf.mxu0
    %v1531 = vadd.f32 0.0, %v1530
    %1532 = vmatmul.f32.gmra.mxu0 %v1511
    %v1533 = vpop.f32.mrf.mxu0
    %v1534 = vadd.f32 0.0, %v1533
    %1535 = vdwg.mxu0
    %1536 = vrot.lane.b32.xlu0 %v1438, 120
    %v1537 = vpop.permute.xlu0 %1536
    %1538 = vrot.lane.b32.xlu0 %v1439, 120
    %v1539 = vpop.permute.xlu0 %1538
    %1540 = vrot.lane.b32.xlu0 %v1433, 88
    %v1541 = vpop.permute.xlu0 %1540
    %1542 = vrot.lane.b32.xlu0 %v1436, 88
    %v1543 = vpop.permute.xlu0 %1542
    %v1544 = vsel %vm167, %v1537, 0
    %v1546 = vsel %vm167, %v1539, 0
    %v1548 = vsel %vm167, %v1541, 0
    %v1550 = vsel %vm167, %v1543, 0
    %1552 = vmatpush.xpose.msra.mxu0 0.0
    %1553 = vmatpush.xpose.msra.mxu0 0.0
    %1554 = vmatpush.xpose.msra.mxu0 0.0
    %1555 = vmatpush.xpose.msra.mxu0 0.0
    %1556 = vmatpush.xpose.msra.mxu0 0.0
    %1557 = vmatpush.xpose.msra.mxu0 0.0
    %1558 = vmatpush.xpose.msra.mxu0 0.0
    %1559 = vmatpush.xpose.msra.mxu0 0.0
    %1560 = vmatpush.xpose.msra.mxu0 0.0
    %1561 = vmatpush.xpose.msra.mxu0 0.0
    %1562 = vmatpush.xpose.msra.mxu0 0.0
    %1563 = vmatpush.xpose.msra.mxu0 0.0
    %1564 = vmatpush.xpose.msra.mxu0 0.0
    %1565 = vmatpush.xpose.msra.mxu0 0.0
    %1566 = vmatpush.xpose.msra.mxu0 %v1550
    %1567 = vmatpush.xpose.msra.mxu0 %v1548
    %1568 = vmatmul.f32.gmra.mxu0 %v1544
    %v1569 = vpop.f32.mrf.mxu0
    %v1570 = vadd.f32 %v127, %v1569
    %1571 = vmatmul.f32.gmra.mxu0 %v1546
    %v1572 = vpop.f32.mrf.mxu0
    %v1573 = vadd.f32 %v128, %v1572
    %1574 = vdwg.mxu0
    %v1575 = vsel %vm201, %v1570, -inf
    %1576 = vmax.xlane.f32.xlu0 %v1575
    %v1577 = vpop.xlane.xlu0 %1576
    %v1578 = vsel %vm201, %v1573, -inf
    %1579 = vmax.xlane.f32.xlu0 %v1578
    %v1580 = vpop.xlane.xlu0 %1579
    %v1581 = vsub.f32 %v1570, %v1577
    %v1582 = vsub.f32 %v1573, %v1580
    %v1583 = vmul.f32 %v1581, 1.442695
    %v1584 = vpow.pop %v1583
    %v1585 = vmul.f32 %v1582, 1.442695
    %v1586 = vpow.pop %v1585
    %v1587 = vsel %vm201, %v1584, 0.0
    %1588 = vadd.xlane.f32.xlu0 %v1587
    %v1589 = vpop.xlane.xlu0 %1588
    %v1590 = vsel %vm201, %v1586, 0.0
    %1591 = vadd.xlane.f32.xlu0 %v1590
    %v1592 = vpop.xlane.xlu0 %1591
    %v1593 = vrcp.pop %v1589
    %v1594 = vrcp.pop %v1592
    %v1595 = vmul.f32 %v1584, %v1593
    %v1596 = vmul.f32 %v1586, %v1594
    %1597 = vrot.lane.b32.xlu0 %v1433, 56
    %v1598 = vpop.permute.xlu0 %1597
    %1599 = vrot.lane.b32.xlu0 %v1436, 56
    %v1600 = vpop.permute.xlu0 %1599
    %v1604 = vsel %vm201, %v1595, 0
    %v1607 = vsel %vm201, %v1596, 0
    %1609 = vmatpush.msra.mxu0 0.0
    %1610 = vmatpush.msra.mxu0 0.0
    %1611 = vmatpush.msra.mxu0 0.0
    %1612 = vmatpush.msra.mxu0 0.0
    %1613 = vmatpush.msra.mxu0 0.0
    %1614 = vmatpush.msra.mxu0 0.0
    %1615 = vmatpush.msra.mxu0 0.0
    %1616 = vmatpush.msra.mxu0 0.0
    %1617 = vmatpush.msra.mxu0 0.0
    %1618 = vmatpush.msra.mxu0 0.0
    %1619 = vmatpush.msra.mxu0 0.0
    %1620 = vmatpush.msra.mxu0 0.0
    %1621 = vmatpush.msra.mxu0 0.0
    %1622 = vmatpush.msra.mxu0 0.0
    %1623 = vmatpush.msra.mxu0 %v1600
    %1624 = vmatpush.msra.mxu0 %v1598
    %1625 = vmatmul.f32.gmra.mxu0 %v1604
    %v1626 = vpop.f32.mrf.mxu0
    %v1627 = vadd.f32 0.0, %v1626
    %1628 = vmatmul.f32.gmra.mxu0 %v1607
    %v1629 = vpop.f32.mrf.mxu0
    %v1630 = vadd.f32 0.0, %v1629
    %1631 = vdwg.mxu0
    %1632 = vrot.lane.b32.xlu0 %v1438, 112
    %v1633 = vpop.permute.xlu0 %1632
    %1634 = vrot.lane.b32.xlu0 %v1439, 112
    %v1635 = vpop.permute.xlu0 %1634
    %1636 = vrot.lane.b32.xlu0 %v1433, 80
    %v1637 = vpop.permute.xlu0 %1636
    %1638 = vrot.lane.b32.xlu0 %v1436, 80
    %v1639 = vpop.permute.xlu0 %1638
    %v1640 = vsel %vm167, %v1633, 0
    %v1642 = vsel %vm167, %v1635, 0
    %v1644 = vsel %vm167, %v1637, 0
    %v1646 = vsel %vm167, %v1639, 0
    %1648 = vmatpush.xpose.msra.mxu0 0.0
    %1649 = vmatpush.xpose.msra.mxu0 0.0
    %1650 = vmatpush.xpose.msra.mxu0 0.0
    %1651 = vmatpush.xpose.msra.mxu0 0.0
    %1652 = vmatpush.xpose.msra.mxu0 0.0
    %1653 = vmatpush.xpose.msra.mxu0 0.0
    %1654 = vmatpush.xpose.msra.mxu0 0.0
    %1655 = vmatpush.xpose.msra.mxu0 0.0
    %1656 = vmatpush.xpose.msra.mxu0 0.0
    %1657 = vmatpush.xpose.msra.mxu0 0.0
    %1658 = vmatpush.xpose.msra.mxu0 0.0
    %1659 = vmatpush.xpose.msra.mxu0 0.0
    %1660 = vmatpush.xpose.msra.mxu0 0.0
    %1661 = vmatpush.xpose.msra.mxu0 0.0
    %1662 = vmatpush.xpose.msra.mxu0 %v1646
    %1663 = vmatpush.xpose.msra.mxu0 %v1644
    %1664 = vmatmul.f32.gmra.mxu0 %v1640
    %v1665 = vpop.f32.mrf.mxu0
    %v1666 = vadd.f32 %v127, %v1665
    %1667 = vmatmul.f32.gmra.mxu0 %v1642
    %v1668 = vpop.f32.mrf.mxu0
    %v1669 = vadd.f32 %v128, %v1668
    %1670 = vdwg.mxu0
    %v1671 = vsel %vm201, %v1666, -inf
    %1672 = vmax.xlane.f32.xlu0 %v1671
    %v1673 = vpop.xlane.xlu0 %1672
    %v1674 = vsel %vm201, %v1669, -inf
    %1675 = vmax.xlane.f32.xlu0 %v1674
    %v1676 = vpop.xlane.xlu0 %1675
    %v1677 = vsub.f32 %v1666, %v1673
    %v1678 = vsub.f32 %v1669, %v1676
    %v1679 = vmul.f32 %v1677, 1.442695
    %v1680 = vpow.pop %v1679
    %v1681 = vmul.f32 %v1678, 1.442695
    %v1682 = vpow.pop %v1681
    %v1683 = vsel %vm201, %v1680, 0.0
    %1684 = vadd.xlane.f32.xlu0 %v1683
    %v1685 = vpop.xlane.xlu0 %1684
    %v1686 = vsel %vm201, %v1682, 0.0
    %1687 = vadd.xlane.f32.xlu0 %v1686
    %v1688 = vpop.xlane.xlu0 %1687
    %v1689 = vrcp.pop %v1685
    %v1690 = vrcp.pop %v1688
    %v1691 = vmul.f32 %v1680, %v1689
    %v1692 = vmul.f32 %v1682, %v1690
    %1693 = vrot.lane.b32.xlu0 %v1433, 48
    %v1694 = vpop.permute.xlu0 %1693
    %1695 = vrot.lane.b32.xlu0 %v1436, 48
    %v1696 = vpop.permute.xlu0 %1695
    %v1700 = vsel %vm201, %v1691, 0
    %v1703 = vsel %vm201, %v1692, 0
    %1705 = vmatpush.msra.mxu0 0.0
    %1706 = vmatpush.msra.mxu0 0.0
    %1707 = vmatpush.msra.mxu0 0.0
    %1708 = vmatpush.msra.mxu0 0.0
    %1709 = vmatpush.msra.mxu0 0.0
    %1710 = vmatpush.msra.mxu0 0.0
    %1711 = vmatpush.msra.mxu0 0.0
    %1712 = vmatpush.msra.mxu0 0.0
    %1713 = vmatpush.msra.mxu0 0.0
    %1714 = vmatpush.msra.mxu0 0.0
    %1715 = vmatpush.msra.mxu0 0.0
    %1716 = vmatpush.msra.mxu0 0.0
    %1717 = vmatpush.msra.mxu0 0.0
    %1718 = vmatpush.msra.mxu0 0.0
    %1719 = vmatpush.msra.mxu0 %v1696
    %1720 = vmatpush.msra.mxu0 %v1694
    %1721 = vmatmul.f32.gmra.mxu0 %v1700
    %v1722 = vpop.f32.mrf.mxu0
    %v1723 = vadd.f32 0.0, %v1722
    %1724 = vmatmul.f32.gmra.mxu0 %v1703
    %v1725 = vpop.f32.mrf.mxu0
    %v1726 = vadd.f32 0.0, %v1725
    %1727 = vdwg.mxu0
    %1728 = vrot.lane.b32.xlu0 %v1438, 104
    %v1729 = vpop.permute.xlu0 %1728
    %1730 = vrot.lane.b32.xlu0 %v1439, 104
    %v1731 = vpop.permute.xlu0 %1730
    %1732 = vrot.lane.b32.xlu0 %v1433, 72
    %v1733 = vpop.permute.xlu0 %1732
    %1734 = vrot.lane.b32.xlu0 %v1436, 72
    %v1735 = vpop.permute.xlu0 %1734
    %v1736 = vsel %vm167, %v1729, 0
    %v1738 = vsel %vm167, %v1731, 0
    %v1740 = vsel %vm167, %v1733, 0
    %v1742 = vsel %vm167, %v1735, 0
    %1744 = vmatpush.xpose.msra.mxu0 0.0
    %1745 = vmatpush.xpose.msra.mxu0 0.0
    %1746 = vmatpush.xpose.msra.mxu0 0.0
    %1747 = vmatpush.xpose.msra.mxu0 0.0
    %1748 = vmatpush.xpose.msra.mxu0 0.0
    %1749 = vmatpush.xpose.msra.mxu0 0.0
    %1750 = vmatpush.xpose.msra.mxu0 0.0
    %1751 = vmatpush.xpose.msra.mxu0 0.0
    %1752 = vmatpush.xpose.msra.mxu0 0.0
    %1753 = vmatpush.xpose.msra.mxu0 0.0
    %1754 = vmatpush.xpose.msra.mxu0 0.0
    %1755 = vmatpush.xpose.msra.mxu0 0.0
    %1756 = vmatpush.xpose.msra.mxu0 0.0
    %1757 = vmatpush.xpose.msra.mxu0 0.0
    %1758 = vmatpush.xpose.msra.mxu0 %v1742
    %1759 = vmatpush.xpose.msra.mxu0 %v1740
    %1760 = vmatmul.f32.gmra.mxu0 %v1736
    %v1761 = vpop.f32.mrf.mxu0
    %v1762 = vadd.f32 %v127, %v1761
    %1763 = vmatmul.f32.gmra.mxu0 %v1738
    %v1764 = vpop.f32.mrf.mxu0
    %v1765 = vadd.f32 %v128, %v1764
    %1766 = vdwg.mxu0
    %v1767 = vsel %vm201, %v1762, -inf
    %1768 = vmax.xlane.f32.xlu0 %v1767
    %v1769 = vpop.xlane.xlu0 %1768
    %v1770 = vsel %vm201, %v1765, -inf
    %1771 = vmax.xlane.f32.xlu0 %v1770
    %v1772 = vpop.xlane.xlu0 %1771
    %v1773 = vsub.f32 %v1762, %v1769
    %v1774 = vsub.f32 %v1765, %v1772
    %v1775 = vmul.f32 %v1773, 1.442695
    %v1776 = vpow.pop %v1775
    %v1777 = vmul.f32 %v1774, 1.442695
    %v1778 = vpow.pop %v1777
    %v1779 = vsel %vm201, %v1776, 0.0
    %1780 = vadd.xlane.f32.xlu0 %v1779
    %v1781 = vpop.xlane.xlu0 %1780
    %v1782 = vsel %vm201, %v1778, 0.0
    %1783 = vadd.xlane.f32.xlu0 %v1782
    %v1784 = vpop.xlane.xlu0 %1783
    %v1785 = vrcp.pop %v1781
    %v1786 = vrcp.pop %v1784
    %v1787 = vmul.f32 %v1776, %v1785
    %v1788 = vmul.f32 %v1778, %v1786
    %1789 = vrot.lane.b32.xlu0 %v1433, 40
    %v1790 = vpop.permute.xlu0 %1789
    %1791 = vrot.lane.b32.xlu0 %v1436, 40
    %v1792 = vpop.permute.xlu0 %1791
    %v1796 = vsel %vm201, %v1787, 0
    %v1799 = vsel %vm201, %v1788, 0
    %1801 = vmatpush.msra.mxu0 0.0
    %1802 = vmatpush.msra.mxu0 0.0
    %1803 = vmatpush.msra.mxu0 0.0
    %1804 = vmatpush.msra.mxu0 0.0
    %1805 = vmatpush.msra.mxu0 0.0
    %1806 = vmatpush.msra.mxu0 0.0
    %1807 = vmatpush.msra.mxu0 0.0
    %1808 = vmatpush.msra.mxu0 0.0
    %1809 = vmatpush.msra.mxu0 0.0
    %1810 = vmatpush.msra.mxu0 0.0
    %1811 = vmatpush.msra.mxu0 0.0
    %1812 = vmatpush.msra.mxu0 0.0
    %1813 = vmatpush.msra.mxu0 0.0
    %1814 = vmatpush.msra.mxu0 0.0
    %1815 = vmatpush.msra.mxu0 %v1792
    %1816 = vmatpush.msra.mxu0 %v1790
    %1817 = vmatmul.f32.gmra.mxu0 %v1796
    %v1818 = vpop.f32.mrf.mxu0
    %v1819 = vadd.f32 0.0, %v1818
    %1820 = vmatmul.f32.gmra.mxu0 %v1799
    %v1821 = vpop.f32.mrf.mxu0
    %v1822 = vadd.f32 0.0, %v1821
    %1823 = vdwg.mxu0
    %1826 = vrot.lane.b32.xlu0 %v1627, 8
    %v1827 = vpop.permute.xlu0 %1826
    %1828 = vrot.lane.b32.xlu0 %v1630, 8
    %v1829 = vpop.permute.xlu0 %1828
    %1834 = vrot.lane.b32.xlu0 %v1723, 16
    %v1835 = vpop.permute.xlu0 %1834
    %1836 = vrot.lane.b32.xlu0 %v1726, 16
    %v1837 = vpop.permute.xlu0 %1836
    %1842 = vrot.lane.b32.xlu0 %v1819, 24
    %v1843 = vpop.permute.xlu0 %1842
    %1844 = vrot.lane.b32.xlu0 %v1822, 24
    %v1845 = vpop.permute.xlu0 %1844
    %v1848 = vsel %vm167, %v1531, %v1827
    %v1849 = vsel %vm167, %v1534, %v1829
    %v1850 = vsel %vm201, %v1848, %v1835
    %v1851 = vsel %vm201, %v1849, %v1837
    %v1852 = vsel %vm575, %v1850, %v1843
    %v1853 = vsel %vm575, %v1851, %v1845
    %v1855 = vsel %vm129, %v1852, 0
    %v1858 = vsel %vm129, %v1853, 0
    %1860 = vmatpush.msra.mxu0 0.0
    %1861 = vmatpush.msra.mxu0 0.0
    %1862 = vmatpush.msra.mxu0 0.0
    %1863 = vmatpush.msra.mxu0 0.0
    %1864 = vmatpush.msra.mxu0 0.0
    %1865 = vmatpush.msra.mxu0 0.0
    %1866 = vmatpush.msra.mxu0 0.0
    %1867 = vmatpush.msra.mxu0 0.0
    %1868 = vmatpush.msra.mxu0 0.0
    %1869 = vmatpush.msra.mxu0 0.0
    %1870 = vmatpush.msra.mxu0 0.0
    %1871 = vmatpush.msra.mxu0 0.0
    %1872 = vmatpush.msra.mxu0 %v62
    %1873 = vmatpush.msra.mxu0 %v59
    %1874 = vmatpush.msra.mxu0 %v56
    %1875 = vmatpush.msra.mxu0 %v53
    %1876 = vmatmul.f32.gmra.mxu0 %v1855
    %v1877 = vpop.f32.mrf.mxu0
    %v1878 = vadd.f32 %v75, %v1877
    %1879 = vmatmul.f32.gmra.mxu0 %v1858
    %v1880 = vpop.f32.mrf.mxu0
    %v1881 = vadd.f32 %v75, %v1880
    %1882 = vdwg.mxu0
    %v1883 = vadd.f32 %v1407, %v1878
    %v1884 = vadd.f32 %v1408, %v1881
    %v1885 = vsel %vm129, %v1883, 0.0
    %1886 = vadd.xlane.f32.xlu0 %v1885
    %v1887 = vpop.xlane.xlu0 %1886
    %v1888 = vsel %vm129, %v1884, 0.0
    %1889 = vadd.xlane.f32.xlu0 %v1888
    %v1890 = vpop.xlane.xlu0 %1889
    %v1891 = vmul.f32 %v1887, %v621
    %v1892 = vmul.f32 %v1890, %v621
    %v1893 = vsub.f32 %v1883, %v1891
    %v1894 = vsub.f32 %v1884, %v1892
    %v1895 = vmul.f32 %v1893, %v1893
    %v1896 = vmul.f32 %v1894, %v1894
    %v1897 = vsel %vm129, %v1895, 0.0
    %1898 = vadd.xlane.f32.xlu0 %v1897
    %v1899 = vpop.xlane.xlu0 %1898
    %v1900 = vsel %vm129, %v1896, 0.0
    %1901 = vadd.xlane.f32.xlu0 %v1900
    %v1902 = vpop.xlane.xlu0 %1901
    %v1903 = vmul.f32 %v1899, %v621
    %v1904 = vmul.f32 %v1902, %v621
    %v1905 = vadd.f32 %v1903, 1e-05
    %v1906 = vadd.f32 %v1904, 1e-05
    %v1907 = vrsqrt.pop %v1905
    %v1908 = vmul.f32 %v1907, %v1905
    %v1909 = vmul.f32 %v1908, %v1907
    %v1910 = vmul.f32 0.5, %v1909
    %v1911 = vsub.f32 1.5, %v1910
    %v1912 = vmul.f32 %v1907, %v1911
    %vm1913 = vweird.f32 %v1905
    %vm1914 = vweird.f32 %v1907
    %vm1915 = vmor %vm1913, %vm1914
    %v1916 = vsel %vm1915, %v1907, %v1912
    %v1917 = vrsqrt.pop %v1906
    %v1918 = vmul.f32 %v1917, %v1906
    %v1919 = vmul.f32 %v1918, %v1917
    %v1920 = vmul.f32 0.5, %v1919
    %v1921 = vsub.f32 1.5, %v1920
    %v1922 = vmul.f32 %v1917, %v1921
    %vm1923 = vweird.f32 %v1906
    %vm1924 = vweird.f32 %v1917
    %vm1925 = vmor %vm1923, %vm1924
    %v1926 = vsel %vm1925, %v1917, %v1922
    %v1927 = vmul.f32 %v1893, %v1916
    %v1928 = vmul.f32 %v1894, %v1926
    %v1929 = vmul.f32 %v1927, %v78
    %v1930 = vmul.f32 %v1928, %v78
    %v1931 = vadd.f32 %v1929, %v79
    %v1932 = vadd.f32 %v1930, %v79
    %v1934 = vsel %vm129, %v1931, 0
    %v1937 = vsel %vm129, %v1932, 0
    %1939 = vmatpush.msra.mxu0 0.0
    %1940 = vmatpush.msra.mxu0 0.0
    %1941 = vmatpush.msra.mxu0 0.0
    %1942 = vmatpush.msra.mxu0 0.0
    %1943 = vmatpush.msra.mxu0 0.0
    %1944 = vmatpush.msra.mxu0 0.0
    %1945 = vmatpush.msra.mxu0 0.0
    %1946 = vmatpush.msra.mxu0 0.0
    %1947 = vmatpush.msra.mxu0 0.0
    %1948 = vmatpush.msra.mxu0 0.0
    %1949 = vmatpush.msra.mxu0 0.0
    %1950 = vmatpush.msra.mxu0 0.0
    %1951 = vmatpush.msra.mxu0 %v63
    %1952 = vmatpush.msra.mxu0 %v60
    %1953 = vmatpush.msra.mxu0 %v57
    %1954 = vmatpush.msra.mxu0 %v54
    %1955 = vmatmul.f32.gmra.mxu0 %v1934
    %v1956 = vpop.f32.mrf.mxu0
    %v1957 = vadd.f32 %v76, %v1956
    %1958 = vmatmul.f32.gmra.mxu0 %v1937
    %v1959 = vpop.f32.mrf.mxu0
    %v1960 = vadd.f32 %v76, %v1959
    %1961 = vdwg.mxu0
    %v1962 = vmax.f32 %v1957, 0.0
    %v1963 = vmax.f32 %v1960, 0.0
    %v1965 = vsel %vm695, %v1962, 0
    %v1968 = vsel %vm695, %v1963, 0
    %1970 = vmatpush.msra.mxu0 0.0
    %1971 = vmatpush.msra.mxu0 0.0
    %1972 = vmatpush.msra.mxu0 0.0
    %1973 = vmatpush.msra.mxu0 0.0
    %1974 = vmatpush.msra.mxu0 0.0
    %1975 = vmatpush.msra.mxu0 0.0
    %1976 = vmatpush.msra.mxu0 0.0
    %1977 = vmatpush.msra.mxu0 0.0
    %1978 = vmatpush.msra.mxu0 %v71
    %1979 = vmatpush.msra.mxu0 %v70
    %1980 = vmatpush.msra.mxu0 %v69
    %1981 = vmatpush.msra.mxu0 %v68
    %1982 = vmatpush.msra.mxu0 %v67
    %1983 = vmatpush.msra.mxu0 %v66
    %1984 = vmatpush.msra.mxu0 %v65
    %1985 = vmatpush.msra.mxu0 %v64
    %1986 = vmatmul.f32.gmra.mxu0 %v1965
    %v1987 = vpop.f32.mrf.mxu0
    %v1988 = vadd.f32 %v77, %v1987
    %1989 = vmatmul.f32.gmra.mxu0 %v1968
    %v1990 = vpop.f32.mrf.mxu0
    %v1991 = vadd.f32 %v77, %v1990
    %1992 = vdwg.mxu0
    %v1993 = vadd.f32 %v1931, %v1988
    %v1994 = vadd.f32 %v1932, %v1991
    %v1995 = vsel %vm129, %v1993, 0.0
    %1996 = vadd.xlane.f32.xlu0 %v1995
    %v1997 = vpop.xlane.xlu0 %1996
    %v1998 = vsel %vm129, %v1994, 0.0
    %1999 = vadd.xlane.f32.xlu0 %v1998
    %v2000 = vpop.xlane.xlu0 %1999
    %v2001 = vmul.f32 %v1997, %v621
    %v2002 = vmul.f32 %v2000, %v621
    %v2003 = vsub.f32 %v1993, %v2001
    %v2004 = vsub.f32 %v1994, %v2002
    %v2005 = vmul.f32 %v2003, %v2003
    %v2006 = vmul.f32 %v2004, %v2004
    %v2007 = vsel %vm129, %v2005, 0.0
    %2008 = vadd.xlane.f32.xlu0 %v2007
    %v2009 = vpop.xlane.xlu0 %2008
    %v2010 = vsel %vm129, %v2006, 0.0
    %2011 = vadd.xlane.f32.xlu0 %v2010
    %v2012 = vpop.xlane.xlu0 %2011
    %v2013 = vmul.f32 %v2009, %v621
    %v2014 = vmul.f32 %v2012, %v621
    %v2015 = vadd.f32 %v2013, 1e-05
    %v2016 = vadd.f32 %v2014, 1e-05
    %v2017 = vrsqrt.pop %v2015
    %v2018 = vmul.f32 %v2017, %v2015
    %v2019 = vmul.f32 %v2018, %v2017
    %v2020 = vmul.f32 0.5, %v2019
    %v2021 = vsub.f32 1.5, %v2020
    %v2022 = vmul.f32 %v2017, %v2021
    %vm2023 = vweird.f32 %v2015
    %vm2024 = vweird.f32 %v2017
    %vm2025 = vmor %vm2023, %vm2024
    %v2026 = vsel %vm2025, %v2017, %v2022
    %v2027 = vrsqrt.pop %v2016
    %v2028 = vmul.f32 %v2027, %v2016
    %v2029 = vmul.f32 %v2028, %v2027
    %v2030 = vmul.f32 0.5, %v2029
    %v2031 = vsub.f32 1.5, %v2030
    %v2032 = vmul.f32 %v2027, %v2031
    %vm2033 = vweird.f32 %v2016
    %vm2034 = vweird.f32 %v2027
    %vm2035 = vmor %vm2033, %vm2034
    %v2036 = vsel %vm2035, %v2027, %v2032
    %v2037 = vmul.f32 %v2003, %v2026
    %v2038 = vmul.f32 %v2004, %v2036
    %v2039 = vmul.f32 %v2037, %v80
    %v2040 = vmul.f32 %v2038, %v80
    %v2041 = vadd.f32 %v2039, %v81
    %v2042 = vadd.f32 %v2040, %v81
    %v2043 = vsel %vm129, %v2041, 0.0
    %2044 = vadd.xlane.f32.xlu0 %v2043
    %v2045 = vpop.xlane.xlu0 %2044
    %v2046 = vsel %vm129, %v2042, 0.0
    %2047 = vadd.xlane.f32.xlu0 %v2046
    %v2048 = vpop.xlane.xlu0 %2047
    %v2049 = vmul.f32 %v2045, %v621
    %v2050 = vmul.f32 %v2048, %v621
    %v2051 = vsub.f32 %v2041, %v2049
    %v2052 = vsub.f32 %v2042, %v2050
    %v2053 = vmul.f32 %v2051, %v2051
    %v2054 = vmul.f32 %v2052, %v2052
    %v2055 = vsel %vm129, %v2053, 0.0
    %2056 = vadd.xlane.f32.xlu0 %v2055
    %v2057 = vpop.xlane.xlu0 %2056
    %v2058 = vsel %vm129, %v2054, 0.0
    %2059 = vadd.xlane.f32.xlu0 %v2058
    %v2060 = vpop.xlane.xlu0 %2059
    %v2061 = vmul.f32 %v2057, %v621
    %v2062 = vmul.f32 %v2060, %v621
    %v2063 = vadd.f32 %v2061, 1e-05
    %v2064 = vadd.f32 %v2062, 1e-05
    %v2065 = vrsqrt.pop %v2063
    %v2066 = vmul.f32 %v2065, %v2063
    %v2067 = vmul.f32 %v2066, %v2065
    %v2068 = vmul.f32 0.5, %v2067
    %v2069 = vsub.f32 1.5, %v2068
    %v2070 = vmul.f32 %v2065, %v2069
    %vm2071 = vweird.f32 %v2063
    %vm2072 = vweird.f32 %v2065
    %vm2073 = vmor %vm2071, %vm2072
    %v2074 = vsel %vm2073, %v2065, %v2070
    %v2075 = vrsqrt.pop %v2064
    %v2076 = vmul.f32 %v2075, %v2064
    %v2077 = vmul.f32 %v2076, %v2075
    %v2078 = vmul.f32 0.5, %v2077
    %v2079 = vsub.f32 1.5, %v2078
    %v2080 = vmul.f32 %v2075, %v2079
    %vm2081 = vweird.f32 %v2064
    %vm2082 = vweird.f32 %v2075
    %vm2083 = vmor %vm2081, %vm2082
    %v2084 = vsel %vm2083, %v2075, %v2080
    %v2085 = vmul.f32 %v2051, %v2074
    %v2086 = vmul.f32 %v2052, %v2084
    %v2087 = vmul.f32 %v2085, %v82
    %v2088 = vmul.f32 %v2086, %v82
    %v2089 = vadd.f32 %v2087, %v83
    %v2090 = vadd.f32 %v2088, %v83
    %2091 = vst.msk [vmem:[#allocation7] sm:$0xff] %vm129, %v2089
    %2092 = vst.msk [vmem:[#allocation7 + $0x8] sm:$0xff] %vm129, %v2090
    // Predicated region
    $region26: #{universal_transformer_encoder.1} parent=1 // pred_check
      _
    $region27: #{universal_transformer_encoder.1} parent=1 // pred_check_branch
      %2094 = sbr.rel (0) target = $region29
    $region28: #{universal_transformer_encoder.1} parent=1 // pred_region
      %2096 = vsyncadd [#allocation4], 0
      %s2097 = sshll.u32 [#allocation7], 4
      %s2098 = int_to_ptr.vmem [resolvable:$true] %s2097
      %s2099 = sshll.u32 %s4, 4
      %s2100 = int_to_ptr.hbm [resolvable:$true] %s2099
      %2105 = dma.vmem_to_hbm [thread:$0]  %s2098, 256, %s2100, [#allocation4], 128, 128, 8
    $region29: #{universal_transformer_encoder.1} parent=1 // pred_fallthru
      _
    // Predicated region
    $region30: #{universal_transformer_encoder.1} parent=1 // pred_check
      _
    $region31: #{universal_transformer_encoder.1} parent=1 // pred_check_branch
      %2107 = sbr.rel (0) target = $region33
    $region32: #{universal_transformer_encoder.1} parent=1 // pred_region
      %2109 = dma.done [#allocation4], 256
    $region33: #{universal_transformer_encoder.1} parent=1 // pred_fallthru
      _
    %2110 = vsyncpa [#allocation3], 1
    %2111 = vsyncpa [#allocation6], 1
    %2112 = vsyncpa [#allocation4], 1

</llo_original>
